<compile_context>
chip_gen: v7x
topology: tpu7x:2x2x1
jax: 0.10.0
libtpu: 0.0.40
codegen_flags: <defaults>
</compile_context>

<pallas_src>
import functools

import jax
import jax.numpy as jnp
from jax import lax
from jax.experimental import pallas as pl
from jax.experimental.pallas import tpu as pltpu

EPS = 1e-5                       # torch.nn.InstanceNorm2d default eps
_TARGET_TILE_LANES = 2048        # ~2-4K lanes per row tile (per review)

# VMEM budget: ~100 MiB on v5e/v6e (128 MiB physical), ~51 MiB on v7x (64 MiB).
try:
    _VMEM_CAP = int(pltpu.get_tpu_info().vmem_capacity_bytes)
except Exception:                # conservative fallback (v7x-sized)
    _VMEM_CAP = 64 * 1024 * 1024
_VMEM_LIMIT = min(int(0.8 * _VMEM_CAP), 100 * 1024 * 1024)
_VMEM_PLAN_BUDGET = int(0.75 * _VMEM_LIMIT)


def _round_up(x, m):
    return (x + m - 1) // m * m


def _conv_unit_kernel(strip_ref, w_ref, prm_ref, o_ref, acc_ref, *,
                      kh, wout, wout_pad, hout, th, nb, n_rt):
    """Grid = (batch tiles [parallel], row tiles [arbitrary]).

    One step: convolution for `nb` batch elements x one row tile of `th` output
    rows; InstanceNorm + affine + PReLU run on the last row tile over the resident
    accumulator.

    strip_ref : (nb, 1, C*kw, (th+kh-1)*wout_pad)  column strips for this row tile;
                strip[n, 0, c*kw+j, r*wout_pad + w] = x[n, c, t*th + r, 2w + j]
    w_ref     : (kh, C, C*kw)                       conv weight, row-offset major
    prm_ref   : (C, 3)                              packed [gamma, beta, prelu_alpha]
    o_ref     : (nb, C, n_rt*th*wout_pad)           resident across the row-tile axis
    acc_ref   : (nb, n_rt, C, th*wout_pad) f32      raw conv tiles (VMEM resident)
    """
    t = pl.program_id(1)
    c_out = o_ref.shape[1]
    tp = th * wout_pad

    w_all = w_ref[...]                                # (kh, C, C*kw)

    def for_each_batch(body):
        if nb == 1:
            body(0, 0)                                # static index, no loop
        else:
            lax.fori_loop(0, nb, body, 0, unroll=True)

    def conv_one(n, carry):
        xs = strip_ref.at[n, 0]                       # ref view, no load
        # kh row offsets as kh accumulated MXU matmuls over 128-aligned windows.
        acc = jnp.dot(w_all[0], xs[:, 0:tp], preferred_element_type=jnp.float32)
        for i in range(1, kh):
            acc += jnp.dot(w_all[i], xs[:, i * wout_pad:i * wout_pad + tp],
                           preferred_element_type=jnp.float32)
        acc_ref[n, t] = acc
        return carry

    for_each_batch(conv_one)

    @pl.when(t == n_rt - 1)
    def _finalize():
        prm = prm_ref[...]                            # (C, 3) f32
        gamma = prm[:, 0:1]
        beta = prm[:, 1:2]
        alpha = prm[:, 2:3]
        inv_p = 1.0 / (hout * wout)

        def norm_one(n, carry):
            # Fused single-pass stats (sum + sum of squares, f32).  Zero-padded
            # columns contribute exactly 0 (conv bias dropped), so only the partial
            # last row tile needs masking -- done with an aligned static slice.
            s = jnp.zeros((c_out, 1), jnp.float32)
            ss = jnp.zeros((c_out, 1), jnp.float32)
            for ti in range(n_rt):
                rows_valid = min(th, hout - ti * th)
                a = acc_ref[n, ti]                    # (C, tp) f32
                av = a if rows_valid == th else a[:, :rows_valid * wout_pad]
                s = s + jnp.sum(av, axis=1, keepdims=True)
                ss = ss + jnp.sum(av * av, axis=1, keepdims=True)
            mean = s * inv_p
            var = jnp.maximum(ss * inv_p - mean * mean, 0.0)
            scale = gamma * lax.rsqrt(var + EPS)      # gamma folded into the scale
            shift = beta - mean * scale
            for ti in range(n_rt):
                y = acc_ref[n, ti] * scale + shift
                y = jnp.where(y >= 0, y, alpha * y)   # PReLU, per-channel slope
                o_ref[n, :, ti * tp:(ti + 1) * tp] = y.astype(o_ref.dtype)
            return carry

        for_each_batch(norm_one)


@functools.partial(jax.jit, static_argnames=("k", "compute_dtype", "out_dtype"))
def conv2d_unit(x, weight, bias, gamma, beta, alpha, *, k,
                compute_dtype=jnp.bfloat16, out_dtype=jnp.float32):
    """Forward of Conv2dunit with norm_type='IN' (train == eval semantics).

    x      : (N, C, H, W)   NCHW, like PyTorch
    weight : (C, C, kh, kw) OIHW conv weight
    bias   : (C,)   conv bias -- cancelled exactly by the InstanceNorm mean, unused
    gamma, beta : (C,)  InstanceNorm2d affine params
    alpha  : (C,)   PReLU per-channel slope
    """
    del bias                                   # cancels under the per-(n,c) mean
    kh, kw = k
    sw = 2                                     # stride = (1, 2)
    N, C, H, W = x.shape
    Hout = H - kh + 1
    Wout = (W - kw) // sw + 1
    CK = C * kw

    # ---- tiling: 128-aligned rows, ~_TARGET_TILE_LANES lanes per row tile -------
    Wout_pad = _round_up(Wout, 128)            # aligned kh windows + lane-dense out
    TH = max(1, min(Hout, _TARGET_TILE_LANES // Wout_pad))
    n_rt = -(-Hout // TH)
    Hout_pad = n_rt * TH
    H_pad = Hout_pad + kh - 1
    P_pad = Hout_pad * Wout_pad
    TW_in = (TH + kh - 1) * Wout_pad

    # ---- batch tile nb: VMEM byte budget + keep >= min(4, N) parallel steps -----
    cbytes = jnp.dtype(compute_dtype).itemsize
    obytes = jnp.dtype(out_dtype).itemsize

    def est_vmem(nb_):
        strip_tile = nb_ * CK * TW_in * cbytes              # per pipeline buffer
        out_blk = nb_ * max(C, 8) * P_pad * obytes          # resident output block
        acc = nb_ * n_rt * max(C, 8) * TH * Wout_pad * 4    # f32 scratch
        wgt = kh * max(C, 8) * _round_up(CK, 128) * cbytes
        return 2 * strip_tile + 2 * out_blk + acc + 2 * wgt + (1 << 20)

    min_steps = min(4, N)                      # >= 2x cores on v7x when N allows
    nb = 1
    for cand in range(min(N, 8), 0, -1):
        if N % cand or N // cand < min_steps or est_vmem(cand) > _VMEM_PLAN_BUDGET:
            continue
        nb = cand
        break
    # TODO(synk): if est_vmem(1) exceeds the budget (very large C*H*W), fall back to
    # a two-pass variant (stats kernel + normalize kernel) instead of a resident acc.

    # ---- column strips: cast to compute dtype FIRST; ~kw/sw x of x + a small halo
    xc = x.astype(compute_dtype)
    cols = [xc[:, :, :, j:j + sw * Wout:sw] for j in range(kw)]      # (N,C,H,Wout)
    sb = jnp.stack(cols, axis=2).reshape(N, CK, H, Wout)
    sb = jnp.pad(sb, ((0, 0), (0, 0), (0, H_pad - H), (0, Wout_pad - Wout)))
    # Overlapping row tiles with a (kh-1)-row halo -> plain non-overlapping BlockSpecs
    tiles = [sb[:, :, ti * TH:ti * TH + TH + kh - 1, :] for ti in range(n_rt)]
    strip = jnp.stack(tiles, axis=1).reshape(N, n_rt, CK, TW_in)

    # Weight, row-offset major: w_mat[i, o, c*kw + j] = weight[o, c, i, j].
    w_mat = jnp.transpose(weight, (2, 0, 1, 3)).reshape(kh, C, CK).astype(compute_dtype)
    # Per-channel params packed into one small DMA stream.
    params = jnp.stack([gamma, beta, alpha], axis=1).astype(jnp.float32)     # (C, 3)

    kernel = functools.partial(_conv_unit_kernel, kh=kh, wout=Wout,
                               wout_pad=Wout_pad, hout=Hout, th=TH, nb=nb, n_rt=n_rt)

    out_flat = pl.pallas_call(
        kernel,
        out_shape=jax.ShapeDtypeStruct((N, C, P_pad), out_dtype),
        grid_spec=pltpu.PrefetchScalarGridSpec(
            num_scalar_prefetch=0,
            grid=(N // nb, n_rt),
            in_specs=[
                # NOTE: on v6e, sweeping pipeline_mode=pl.Buffered(3) on this spec can
                # hide DMA jitter once tiles are small; keep 2 buffers on v7x (VMEM).
                pl.BlockSpec((nb, 1, CK, TW_in), lambda b, t: (b, t, 0, 0)),
                pl.BlockSpec((kh, C, CK), lambda b, t: (0, 0, 0)),
                pl.BlockSpec((C, 3), lambda b, t: (0, 0)),
            ],
            out_specs=pl.BlockSpec((nb, C, P_pad), lambda b, t: (b, 0, 0)),
            scratch_shapes=[pltpu.VMEM((nb, n_rt, C, TH * Wout_pad), jnp.float32)],
        ),
        compiler_params=pltpu.CompilerParams(
            dimension_semantics=("parallel", "arbitrary"),
            vmem_limit_bytes=_VMEM_LIMIT),
    )(strip, w_mat, params)

    return out_flat.reshape(N, C, Hout_pad, Wout_pad)[:, :, :Hout, :Wout]


def _reference(x, weight, bias, gamma, beta, alpha, k):
    """Pure-JAX reference (conv via lax.conv_general_dilated)."""
    y = lax.conv_general_dilated(
        x, weight, window_strides=(1, 2), padding="VALID",
        dimension_numbers=("NCHW", "OIHW", "NCHW"))
    y = y + bias.reshape(1, -1, 1, 1)
    mean = jnp.mean(y, axis=(2, 3), keepdims=True)
    var = jnp.mean((y - mean) ** 2, axis=(2, 3), keepdims=True)
    y = (y - mean) * lax.rsqrt(var + EPS)
    y = y * gamma.reshape(1, -1, 1, 1) + beta.reshape(1, -1, 1, 1)
    a = alpha.reshape(1, -1, 1, 1)
    return jnp.where(y >= 0, y, a * y)


if __name__ == "__main__":
    key = jax.random.PRNGKey(0)
    k = (2, 3)                 # kernel (kh, kw) as in Conv2dunit(k, c, norm_type)
    N, C, H, W = 2, 4, 16, 16

    ks = jax.random.split(key, 6)
    x = jax.random.normal(ks[0], (N, C, H, W), jnp.float32)
    weight = jax.random.normal(ks[1], (C, C, k[0], k[1]), jnp.float32) * 0.1
    bias = jax.random.normal(ks[2], (C,), jnp.float32) * 0.1
    gamma = 1.0 + 0.1 * jax.random.normal(ks[3], (C,), jnp.float32)
    beta = 0.1 * jax.random.normal(ks[4], (C,), jnp.float32)
    alpha = jnp.full((C,), 0.25, jnp.float32)    # PReLU default init

    ref = _reference(x, weight, bias, gamma, beta, alpha, k)

    # f32 MXU-operand path (tight check against the f32 reference).
    out_f32 = jax.block_until_ready(
        conv2d_unit(x, weight, bias, gamma, beta, alpha, k=k,
                    compute_dtype=jnp.float32))
    assert out_f32.shape == ref.shape, (out_f32.shape, ref.shape)
    err = float(jnp.max(jnp.abs(out_f32 - ref)))
    assert err < 1e-4, err

    # Default path: bf16 MXU operands (recommended on v5e/v6e/v7x), f32 epilogue.
    out_bf16 = jax.block_until_ready(
        conv2d_unit(x, weight, bias, gamma, beta, alpha, k=k))
    err_bf16 = float(jnp.max(jnp.abs(out_bf16 - ref)))
    assert err_bf16 < 5e-2, err_bf16

    print("KERNEL_OK")
</pallas_src>

<mosaic_0001>
module attributes {stable_mosaic.version = 11 : i64} {
  func.func @_conv_unit_kernel(%arg0: i32, %arg1: i32, %arg2: memref<1x1x12x2048xf32, #tpu.memory_space<vmem>>, %arg3: memref<2x4x12xf32, #tpu.memory_space<vmem>>, %arg4: memref<4x3xf32, #tpu.memory_space<vmem>>, %arg5: memref<1x4x1920xf32, #tpu.memory_space<vmem>>, %arg6: memref<1x1x4x1920xf32, #tpu.memory_space<vmem>>) attributes {dimension_semantics = [#tpu.dimension_semantics<parallel>, #tpu.dimension_semantics<arbitrary>], iteration_bounds = array<i64: 2, 1>, scalar_prefetch = 0 : i64, scratch_operands = 1 : i64, tpu.core_type = #tpu.core_type<tc>, window_params = [{transform_indices = @transform_0, window_bounds = array<i64: 1, 1, 12, 2048>}, {pipeline_mode = #tpu.pipeline_mode<synchronous>, transform_indices = @transform_1, window_bounds = array<i64: 2, 4, 12>}, {pipeline_mode = #tpu.pipeline_mode<synchronous>, transform_indices = @transform_2, window_bounds = array<i64: 4, 3>}, {transform_indices = @transform_3, window_bounds = array<i64: 1, 4, 1920>}]} {
    %c0 = arith.constant 0 : index
    %c0_0 = arith.constant 0 : index
    %c0_1 = arith.constant 0 : index
    %0 = vector.load %arg3[%c0, %c0_0, %c0_1] : memref<2x4x12xf32, #tpu.memory_space<vmem>>, vector<2x4x12xf32>
    %1 = vector.extract_strided_slice %0 {offsets = [0, 0, 0], sizes = [1, 4, 12], strides = [1, 1, 1]} : vector<2x4x12xf32> to vector<1x4x12xf32>
    %2 = vector.shape_cast %1 : vector<1x4x12xf32> to vector<4x12xf32>
    %c0_i32 = arith.constant 0 : i32
    %c0_i32_2 = arith.constant 0 : i32
    %c0_i32_3 = arith.constant 0 : i32
    %c0_i32_4 = arith.constant 0 : i32
    %3 = tpu.memref_slice %arg2[%c0_i32, %c0_i32_2, %c0_i32_3, %c0_i32_4] : memref<1x1x12x2048xf32, #tpu.memory_space<vmem>> -> memref<1x1x12x2048xf32, #tpu.memory_space<vmem>>
    %4 = tpu.memref_squeeze %3 : memref<1x1x12x2048xf32, #tpu.memory_space<vmem>> -> memref<12x2048xf32, #tpu.memory_space<vmem>>
    %c0_5 = arith.constant 0 : index
    %c0_6 = arith.constant 0 : index
    %5 = vector.load %4[%c0_5, %c0_6] : memref<12x2048xf32, #tpu.memory_space<vmem>>, vector<12x1920xf32>
    %cst = arith.constant dense<0.000000e+00> : vector<4x1920xf32>
    %6 = tpu.matmul %2, %5, %cst {dimension_numbers = #tpu.dot_dimension_numbers<[1], [0], [0], [1], [0, 0, 1, 1], [], []>} : vector<4x12xf32>, vector<12x1920xf32>, vector<4x1920xf32> -> vector<4x1920xf32>
    %7 = vector.extract_strided_slice %0 {offsets = [1, 0, 0], sizes = [1, 4, 12], strides = [1, 1, 1]} : vector<2x4x12xf32> to vector<1x4x12xf32>
    %8 = vector.shape_cast %7 : vector<1x4x12xf32> to vector<4x12xf32>
    %c0_i32_7 = arith.constant 0 : i32
    %c0_i32_8 = arith.constant 0 : i32
    %c0_i32_9 = arith.constant 0 : i32
    %c0_i32_10 = arith.constant 0 : i32
    %9 = tpu.memref_slice %arg2[%c0_i32_7, %c0_i32_8, %c0_i32_9, %c0_i32_10] : memref<1x1x12x2048xf32, #tpu.memory_space<vmem>> -> memref<1x1x12x2048xf32, #tpu.memory_space<vmem>>
    %10 = tpu.memref_squeeze %9 : memref<1x1x12x2048xf32, #tpu.memory_space<vmem>> -> memref<12x2048xf32, #tpu.memory_space<vmem>>
    %c0_11 = arith.constant 0 : index
    %c128 = arith.constant 128 : index
    %11 = vector.load %10[%c0_11, %c128] : memref<12x2048xf32, #tpu.memory_space<vmem>>, vector<12x1920xf32>
    %cst_12 = arith.constant dense<0.000000e+00> : vector<4x1920xf32>
    %12 = tpu.matmul %8, %11, %cst_12 {dimension_numbers = #tpu.dot_dimension_numbers<[1], [0], [0], [1], [0, 0, 1, 1], [], []>} : vector<4x12xf32>, vector<12x1920xf32>, vector<4x1920xf32> -> vector<4x1920xf32>
    %13 = arith.addf %6, %12 : vector<4x1920xf32>
    %c0_13 = arith.constant 0 : index
    %14 = arith.index_cast %arg1 : i32 to index
    %c0_14 = arith.constant 0 : index
    %c0_15 = arith.constant 0 : index
    %15 = vector.load %arg6[%c0_13, %14, %c0_14, %c0_15] : memref<1x1x4x1920xf32, #tpu.memory_space<vmem>>, vector<1x1x4x1920xf32>
    %16 = vector.shape_cast %15 : vector<1x1x4x1920xf32> to vector<4x1920xf32>
    %17 = vector.shape_cast %13 : vector<4x1920xf32> to vector<1x1x4x1920xf32>
    tpu.vector_store %arg6[%c0_13, %14, %c0_14, %c0_15], %17 {strides = array<i32>} : memref<1x1x4x1920xf32, #tpu.memory_space<vmem>>, vector<1x1x4x1920xf32>,
    %c0_i32_16 = arith.constant 0 : i32
    %18 = arith.cmpi eq, %arg1, %c0_i32_16 : i32
    %19 = arith.extui %18 : i1 to i32
    %c0_i32_17 = arith.constant 0 : i32
    %20 = arith.cmpi ne, %19, %c0_i32_17 : i32
    scf.if %20 {
      %c0_18 = arith.constant 0 : index
      %c0_19 = arith.constant 0 : index
      %21 = vector.load %arg4[%c0_18, %c0_19] : memref<4x3xf32, #tpu.memory_space<vmem>>, vector<4x3xf32>
      %22 = vector.extract_strided_slice %21 {offsets = [0, 0], sizes = [4, 1], strides = [1, 1]} : vector<4x3xf32> to vector<4x1xf32>
      %23 = vector.extract_strided_slice %21 {offsets = [0, 1], sizes = [4, 1], strides = [1, 1]} : vector<4x3xf32> to vector<4x1xf32>
      %24 = vector.extract_strided_slice %21 {offsets = [0, 2], sizes = [4, 1], strides = [1, 1]} : vector<4x3xf32> to vector<4x1xf32>
      %cst_20 = arith.constant 0.000000e+00 : f32
      %25 = vector.broadcast %cst_20 : f32 to vector<4x1xf32>
      %cst_21 = arith.constant 0.000000e+00 : f32
      %26 = vector.broadcast %cst_21 : f32 to vector<4x1xf32>
      %c0_22 = arith.constant 0 : index
      %c0_23 = arith.constant 0 : index
      %c0_24 = arith.constant 0 : index
      %c0_25 = arith.constant 0 : index
      %27 = vector.load %arg6[%c0_22, %c0_23, %c0_24, %c0_25] : memref<1x1x4x1920xf32, #tpu.memory_space<vmem>>, vector<1x1x4x1920xf32>
      %28 = vector.shape_cast %27 : vector<1x1x4x1920xf32> to vector<4x1920xf32>
      %cst_26 = arith.constant dense<0.000000e+00> : vector<4xf32>
      %29 = vector.multi_reduction <add>, %28, %cst_26 [1] : vector<4x1920xf32> to vector<4xf32>
      %30 = vector.shape_cast %29 : vector<4xf32> to vector<4x1xf32>
      %31 = arith.addf %25, %30 : vector<4x1xf32>
      %32 = arith.mulf %28, %28 : vector<4x1920xf32>
      %cst_27 = arith.constant dense<0.000000e+00> : vector<4xf32>
      %33 = vector.multi_reduction <add>, %32, %cst_27 [1] : vector<4x1920xf32> to vector<4xf32>
      %34 = vector.shape_cast %33 : vector<4xf32> to vector<4x1xf32>
      %35 = arith.addf %26, %34 : vector<4x1xf32>
      %cst_28 = arith.constant 9.523810e-03 : f32
      %36 = vector.broadcast %cst_28 : f32 to vector<4x1xf32>
      %37 = arith.mulf %31, %36 : vector<4x1xf32>
      %cst_29 = arith.constant 9.523810e-03 : f32
      %38 = vector.broadcast %cst_29 : f32 to vector<4x1xf32>
      %39 = arith.mulf %35, %38 : vector<4x1xf32>
      %40 = arith.mulf %37, %37 : vector<4x1xf32>
      %41 = arith.subf %39, %40 : vector<4x1xf32>
      %cst_30 = arith.constant 0.000000e+00 : f32
      %42 = vector.broadcast %cst_30 : f32 to vector<4x1xf32>
      %43 = arith.maximumf %41, %42 : vector<4x1xf32>
      %cst_31 = arith.constant 9.99999974E-6 : f32
      %44 = vector.broadcast %cst_31 : f32 to vector<4x1xf32>
      %45 = arith.addf %43, %44 : vector<4x1xf32>
      %46 = math.rsqrt %45 : vector<4x1xf32>
      %47 = arith.mulf %22, %46 : vector<4x1xf32>
      %48 = arith.mulf %37, %47 : vector<4x1xf32>
      %49 = arith.subf %23, %48 : vector<4x1xf32>
      %c0_32 = arith.constant 0 : index
      %c0_33 = arith.constant 0 : index
      %c0_34 = arith.constant 0 : index
      %c0_35 = arith.constant 0 : index
      %50 = vector.load %arg6[%c0_32, %c0_33, %c0_34, %c0_35] : memref<1x1x4x1920xf32, #tpu.memory_space<vmem>>, vector<1x1x4x1920xf32>
      %51 = vector.shape_cast %50 : vector<1x1x4x1920xf32> to vector<4x1920xf32>
      %52 = vector.broadcast %47 : vector<4x1xf32> to vector<4x1920xf32>
      %53 = arith.mulf %51, %52 : vector<4x1920xf32>
      %54 = vector.broadcast %49 : vector<4x1xf32> to vector<4x1920xf32>
      %55 = arith.addf %53, %54 : vector<4x1920xf32>
      %cst_36 = arith.constant 0.000000e+00 : f32
      %56 = vector.broadcast %cst_36 : f32 to vector<4x1920xf32>
      %57 = arith.cmpf oge, %55, %56 : vector<4x1920xf32>
      %58 = vector.broadcast %24 : vector<4x1xf32> to vector<4x1920xf32>
      %59 = arith.mulf %58, %55 : vector<4x1920xf32>
      %60 = arith.select %57, %55, %59 : vector<4x1920xi1>, vector<4x1920xf32>
      %c0_37 = arith.constant 0 : index
      %c0_38 = arith.constant 0 : index
      %c0_39 = arith.constant 0 : index
      %61 = vector.load %arg5[%c0_37, %c0_38, %c0_39] : memref<1x4x1920xf32, #tpu.memory_space<vmem>>, vector<1x4x1920xf32>
      %62 = vector.shape_cast %61 : vector<1x4x1920xf32> to vector<4x1920xf32>
      %63 = vector.shape_cast %60 : vector<4x1920xf32> to vector<1x4x1920xf32>
      tpu.vector_store %arg5[%c0_37, %c0_38, %c0_39], %63 {strides = array<i32>} : memref<1x4x1920xf32, #tpu.memory_space<vmem>>, vector<1x4x1920xf32>,
    } else {
    }
    return
  }
  func.func @transform_0(%arg0: i32, %arg1: i32) -> (i32, i32, i32, i32) {
    %c0_i32 = arith.constant 0 : i32
    %c0_i32_0 = arith.constant 0 : i32
    %c0_i32_1 = arith.constant 0 : i32
    return %arg0, %arg1, %c0_i32, %c0_i32_0 : i32, i32, i32, i32
  }
  func.func @transform_1(%arg0: i32, %arg1: i32) -> (i32, i32, i32) {
    %c0_i32 = arith.constant 0 : i32
    %c0_i32_0 = arith.constant 0 : i32
    %c0_i32_1 = arith.constant 0 : i32
    %c0_i32_2 = arith.constant 0 : i32
    return %c0_i32, %c0_i32_0, %c0_i32_1 : i32, i32, i32
  }
  func.func @transform_2(%arg0: i32, %arg1: i32) -> (i32, i32) {
    %c0_i32 = arith.constant 0 : i32
    %c0_i32_0 = arith.constant 0 : i32
    %c0_i32_1 = arith.constant 0 : i32
    return %c0_i32, %c0_i32_0 : i32, i32
  }
  func.func @transform_3(%arg0: i32, %arg1: i32) -> (i32, i32, i32) {
    %c0_i32 = arith.constant 0 : i32
    %c0_i32_0 = arith.constant 0 : i32
    %c0_i32_1 = arith.constant 0 : i32
    return %arg0, %c0_i32, %c0_i32_0 : i32, i32, i32
  }
}

</mosaic_0001>

<llo_original>
// kernel: conv2d_unit.1
$region0: #{conv2d_unit.1}
  #allocation0 [shape = 'u32[]', space=smem, size = 0x4, offset = 0x4, fixed_abs, tag = 'smem constant byte address 0x4 - core index']
  #allocation1 [shape = 'u32[144,128]{1,0:T(1,128)}', space=vmem, size = 0x12000, scoped, tag = 'internal scratch']
  #allocation2 [shape = 'f32[1,1,4,1920]{3,2,1,0:T(4,128)}', space=vmem, size = 0x7800, scoped, tag = 'scratch operand']
  %s0 = inlined_call_operand.vmem [shape: f32[2,1,12,2048], index: 0, kind: input, shape index: {}]
  %s1 = inlined_call_operand.vmem [shape: f32[2,4,12], index: 1, kind: input, shape index: {}]
  %s2 = inlined_call_operand.vmem [shape: f32[4,3], index: 2, kind: input, shape index: {}]
  %s3 = inlined_call_operand.vmem [shape: f32[2,4,1920], index: 3, kind: output, shape index: {}]
  %s4 = sld [smem:[#allocation0]]
  $region49: #{conv2d_unit.1} parent=0
    _
  %s6 = ssub.s32 1, %s4
  %s7 = scalar_select 0, %s6, %s4
  loop: start=0, step=1, limit=4
  $region2: #{conv2d_unit.1} parent=0 // loop_pre_header
    _
  $region3: #{conv2d_unit.1} parent=0 // loop_header
    %s9 = sphi 0, %s13
    %p10 = scmp.ge.s32.totalorder %s9, 4
    %s16 = sphi 0, %s28
    %s17 = sphi 0, %s24
    %s18 = sphi 0, %s16
    %s19 = sphi 0, %s17
    %s20 = sphi 0, %s18
    %s21 = sphi 0, %s19
    %s33 = sphi 0, %s35
    %s36 = sphi 0, %s33
    %s37 = sphi 0, %s36
    %s53 = sphi 0, %s37
    %s57 = sphi 0, %s57
    %s59 = sphi 0, %s57
    %s60 = sphi 0, %s59
    %s74 = sphi 0, %s60
    %s78 = sphi 0, %s78
    %s80 = sphi 0, %s78
    %s81 = sphi 0, %s80
    %s95 = sphi 0, %s81
    %s101 = sphi 0, %s103
    %s104 = sphi 0, %s101
    %s105 = sphi 0, %s104
    %s121 = sphi 0, %s105
  $region4: #{conv2d_unit.1} parent=0 // loop_header_branch
    %12 = sbr.rel (%p10) target = $region8
  $region5: #{conv2d_unit.1} parent=0 // loop_body
    %s14 = ssub.s32 %s9, 1
    %s15 = ssub.s32 %s9, 2
    %s22 = sadd.s32 1, %s17
    %p23 = scmp.ge.s32.totalorder %s22, 1
    %s24 = scalar_select %p23, 0, %s22
    %s25 = sadd.s32 1, %s16
    %s26 = scalar_select %p23, %s25, %s16
    %p27 = scmp.ge.s32.totalorder %s26, 2
    %s28 = scalar_select %p27, 0, %s26
    %s29 = ssub.s32 %s16, %s28
    %s30 = ssub.s32 %s17, %s24
    %s31 = sor.u32 %s29, %s30
    %p32 = scmp.eq.s32.totalorder %s31, 0
    %s34 = sadd.s32 %s33, 1
    %s35 = scalar_select %p32, %s33, %s34
    %p38 = pneg %p32
    %p39 = scmp.eq.s32.totalorder %s9, 1
    %p40 = por %p38, %p39
    %p41 = scmp.ne.s32.totalorder %s33, %s36
    %p42 = scmp.eq.s32.totalorder %s9, 0
    %p43 = por %p41, %p42
    %p44 = scmp.ne.s32.totalorder %s33, %s36
    %p45 = scmp.eq.s32.totalorder %s14, 1
    %p46 = por %p44, %p45
    %p47 = scmp.ne.s32.totalorder %s36, %s37
    %p48 = scmp.eq.s32.totalorder %s14, 0
    %p49 = por %p47, %p48
    %p50 = scmp.ne.s32.totalorder %s36, %s37
    %p51 = scmp.eq.s32.totalorder %s15, 1
    %p52 = por %p50, %p51
    %p54 = scmp.ne.s32.totalorder %s37, %s53
    %p55 = scmp.eq.s32.totalorder %s15, 0
    %p56 = por %p54, %p55
    %s58 = sadd.s32 %s57, 1
    %p61 = scmp.eq.s32.totalorder %s9, 1
    %p62 = scmp.ne.s32.totalorder %s57, %s59
    %p63 = scmp.eq.s32.totalorder %s9, 0
    %p64 = por %p62, %p63
    %p65 = scmp.ne.s32.totalorder %s57, %s59
    %p66 = scmp.eq.s32.totalorder %s14, 1
    %p67 = por %p65, %p66
    %p68 = scmp.ne.s32.totalorder %s59, %s60
    %p69 = scmp.eq.s32.totalorder %s14, 0
    %p70 = por %p68, %p69
    %p71 = scmp.ne.s32.totalorder %s59, %s60
    %p72 = scmp.eq.s32.totalorder %s15, 1
    %p73 = por %p71, %p72
    %p75 = scmp.ne.s32.totalorder %s60, %s74
    %p76 = scmp.eq.s32.totalorder %s15, 0
    %p77 = por %p75, %p76
    %s79 = sadd.s32 %s78, 1
    %p82 = scmp.eq.s32.totalorder %s9, 1
    %p83 = scmp.ne.s32.totalorder %s78, %s80
    %p84 = scmp.eq.s32.totalorder %s9, 0
    %p85 = por %p83, %p84
    %p86 = scmp.ne.s32.totalorder %s78, %s80
    %p87 = scmp.eq.s32.totalorder %s14, 1
    %p88 = por %p86, %p87
    %p89 = scmp.ne.s32.totalorder %s80, %s81
    %p90 = scmp.eq.s32.totalorder %s14, 0
    %p91 = por %p89, %p90
    %p92 = scmp.ne.s32.totalorder %s80, %s81
    %p93 = scmp.eq.s32.totalorder %s15, 1
    %p94 = por %p92, %p93
    %p96 = scmp.ne.s32.totalorder %s81, %s95
    %p97 = scmp.eq.s32.totalorder %s15, 0
    %p98 = por %p96, %p97
    %s99 = ssub.s32 %s16, %s28
    %p100 = scmp.eq.s32.totalorder %s99, 0
    %s102 = sadd.s32 %s101, 1
    %s103 = scalar_select %p100, %s101, %s102
    %p106 = pneg %p100
    %p107 = scmp.eq.s32.totalorder %s9, 1
    %p108 = por %p106, %p107
    %p109 = scmp.ne.s32.totalorder %s101, %s104
    %p110 = scmp.eq.s32.totalorder %s9, 0
    %p111 = por %p109, %p110
    %p112 = scmp.ne.s32.totalorder %s101, %s104
    %p113 = scmp.eq.s32.totalorder %s14, 1
    %p114 = por %p112, %p113
    %p115 = scmp.ne.s32.totalorder %s104, %s105
    %p116 = scmp.eq.s32.totalorder %s14, 0
    %p117 = por %p115, %p116
    %p118 = scmp.ne.s32.totalorder %s104, %s105
    %p119 = scmp.eq.s32.totalorder %s15, 1
    %p120 = por %p118, %p119
    %p122 = scmp.ne.s32.totalorder %s105, %s121
    %p123 = scmp.eq.s32.totalorder %s15, 0
    %p124 = por %p122, %p123
    %p125 = scmp.le.s32.totalorder 1, %s9
    %p126 = scmp.lt.s32.totalorder %s9, 3
    %p127 = pnand %p125, %p126
    %p128 = pneg %p127
    // Predicated region
    $region9: #{conv2d_unit.1} parent=5 // pred_check
      _
    $region10: #{conv2d_unit.1} parent=5 // pred_check_branch
      %130 = sbr.rel (%p127) target = $region12
    $region11: #{conv2d_unit.1} parent=5 // pred_region
      %s131 = ssub.s32 %s9, 1
      // Predicated region
      $region13: #{conv2d_unit.1} parent=11 // pred_check
        %p132 = pneg %p70
      $region14: #{conv2d_unit.1} parent=11 // pred_check_branch
        %134 = sbr.rel (%p132) target = $region16
      $region15: #{conv2d_unit.1} parent=11 // pred_region
        _
      $region16: #{conv2d_unit.1} parent=11 // pred_fallthru
        _
      // Predicated region
      $region17: #{conv2d_unit.1} parent=11 // pred_check
        %p135 = pneg %p91
      $region18: #{conv2d_unit.1} parent=11 // pred_check_branch
        %137 = sbr.rel (%p135) target = $region20
      $region19: #{conv2d_unit.1} parent=11 // pred_region
        _
      $region20: #{conv2d_unit.1} parent=11 // pred_fallthru
        _
    $region12: #{conv2d_unit.1} parent=5 // pred_fallthru
      _
    %p138 = scmp.lt.s32.totalorder %s9, 2
    // Predicated region
    $region21: #{conv2d_unit.1} parent=5 // pred_check
      %p139 = pneg %p138
    $region22: #{conv2d_unit.1} parent=5 // pred_check_branch
      %141 = sbr.rel (%p139) target = $region24
    $region23: #{conv2d_unit.1} parent=5 // pred_region
      // Predicated region
      $region25: #{conv2d_unit.1} parent=23 // pred_check
        %p142 = pneg %p43
      $region26: #{conv2d_unit.1} parent=23 // pred_check_branch
        %144 = sbr.rel (%p142) target = $region28
      $region27: #{conv2d_unit.1} parent=23 // pred_region
        %p145 = scmp.lt.s32.totalorder %s16, 1
        %s146 = scalar_select %p145, %s16, 1
        %p147 = scmp.lt.s32.totalorder %s17, 0
        %s148 = scalar_select %p147, %s17, 0
        %s149 = smul.addr %s148, 32
        %s150 = smul.addr %s146, 32
        %s151 = sadd.s32 %s149, %s150
        %s152 = smul.addr %s151, 8
        %s153 = scalar_lea.vmem %s0, %s152
      $region28: #{conv2d_unit.1} parent=23 // pred_fallthru
        _
    $region24: #{conv2d_unit.1} parent=5 // pred_fallthru
      _
    %p154 = scmp.le.s32.totalorder 1, %s9
    %p155 = scmp.lt.s32.totalorder %s9, 3
    %p156 = pnand %p154, %p155
    %p157 = pneg %p156
    // Predicated region
    $region29: #{conv2d_unit.1} parent=5 // pred_check
      _
    $region30: #{conv2d_unit.1} parent=5 // pred_check_branch
      %159 = sbr.rel (%p156) target = $region32
    $region31: #{conv2d_unit.1} parent=5 // pred_region
      %s160 = ssub.s32 %s9, 1
      %p161 = scmp.lt.s32.totalorder %s18, 1
      %s162 = scalar_select %p161, %s18, 1
      %p163 = scmp.lt.s32.totalorder %s19, 0
      %s164 = scalar_select %p163, %s19, 0
      %s165 = smul.addr %s164, 32
      %s166 = smul.addr %s162, 32
      %s167 = sadd.s32 %s165, %s166
      %s168 = smul.addr %s167, 8
      %s169 = scalar_lea.vmem %s0, %s168
      %p170 = pneg %p49
      %p171 = pneg %p46
      %p172 = pneg %p70
      %p173 = pneg %p67
      %p174 = pneg %p91
      %p175 = pneg %p88
      %p176 = pneg %p117
      %p177 = pneg %p114
      %p178 = scmp.lt.s32.totalorder %s18, 1
      %s179 = scalar_select %p178, %s18, 1
      %s180 = smul.addr %s179, 15
      %s181 = smul.addr %s180, 4
      %s182 = scalar_lea.vmem %s3, %s181
      %p183 = scmp.lt.s32.totalorder %s18, 1
      %s184 = scalar_select %p183, %s18, 1
      %p185 = scmp.lt.s32.totalorder %s19, 0
      %s186 = scalar_select %p185, %s19, 0
      %s187 = smul.addr %s186, 32
      %s188 = smul.addr %s184, 32
      %s189 = sadd.s32 %s187, %s188
      %s190 = smul.addr %s189, 8
      %s191 = scalar_lea.vmem %s0, %s190
      %p192 = scmp.lt.s32.totalorder %s18, 1
      %s193 = scalar_select %p192, %s18, 1
      %s194 = smul.addr %s193, 15
      %s195 = smul.addr %s194, 4
      %s196 = scalar_lea.vmem %s3, %s195
      %v197 = vld [vmem:[%s1] sm:$0xf]
      %v198 = vld [vmem:[%s1 + $0x4] sm:$0xf]
      %v199 = vld [vmem:[%s191] sm:$0xff]
      %v200 = vld [vmem:[%s191 + $0x8] sm:$0xff]
      %v201 = vld [vmem:[%s191 + $0x10] sm:$0xff]
      %v202 = vld [vmem:[%s191 + $0x18] sm:$0xff]
      %v203 = vld [vmem:[%s191 + $0x20] sm:$0xff]
      %v204 = vld [vmem:[%s191 + $0x28] sm:$0xff]
      %v205 = vld [vmem:[%s191 + $0x30] sm:$0xff]
      %v206 = vld [vmem:[%s191 + $0x38] sm:$0xff]
      %v207 = vld [vmem:[%s191 + $0x40] sm:$0xff]
      %v208 = vld [vmem:[%s191 + $0x48] sm:$0xff]
      %v209 = vld [vmem:[%s191 + $0x50] sm:$0xff]
      %v210 = vld [vmem:[%s191 + $0x58] sm:$0xff]
      %v211 = vld [vmem:[%s191 + $0x60] sm:$0xff]
      %v212 = vld [vmem:[%s191 + $0x68] sm:$0xff]
      %v213 = vld [vmem:[%s191 + $0x70] sm:$0xff]
      %v214 = vld [vmem:[%s191 + $0x80] sm:$0xf]
      %v215 = vld [vmem:[%s191 + $0x88] sm:$0xf]
      %v216 = vld [vmem:[%s191 + $0x90] sm:$0xf]
      %v217 = vld [vmem:[%s191 + $0x98] sm:$0xf]
      %v218 = vld [vmem:[%s191 + $0xa0] sm:$0xf]
      %v219 = vld [vmem:[%s191 + $0xa8] sm:$0xf]
      %v220 = vld [vmem:[%s191 + $0xb0] sm:$0xf]
      %v221 = vld [vmem:[%s191 + $0xb8] sm:$0xf]
      %v222 = vld [vmem:[%s191 + $0xc0] sm:$0xf]
      %v223 = vld [vmem:[%s191 + $0xc8] sm:$0xf]
      %v224 = vld [vmem:[%s191 + $0xd0] sm:$0xf]
      %v225 = vld [vmem:[%s191 + $0xd8] sm:$0xf]
      %v226 = vld [vmem:[%s191 + $0xe0] sm:$0xf]
      %v227 = vld [vmem:[%s191 + $0xe8] sm:$0xf]
      %v228 = vld [vmem:[%s191 + $0xf0] sm:$0xf]
      %v229 = vld [vmem:[%s191 + $0x78] sm:$0xff]
      %v230 = vld [vmem:[%s191 + $0xf8] sm:$0xf]
      %vm231 = vcmask 97280
      %v233 = vsel %vm231, %v198, 0
      %vm235 = vcmask 1043456
      %v237 = vsel %vm235, %v215, 0
      %v240 = vsel %vm235, %v216, 0
      %v243 = vsel %vm235, %v217, 0
      %v246 = vsel %vm235, %v218, 0
      %v249 = vsel %vm235, %v219, 0
      %v252 = vsel %vm235, %v220, 0
      %v255 = vsel %vm235, %v221, 0
      %v258 = vsel %vm235, %v222, 0
      %v261 = vsel %vm235, %v223, 0
      %v264 = vsel %vm235, %v224, 0
      %v267 = vsel %vm235, %v225, 0
      %v270 = vsel %vm235, %v226, 0
      %v273 = vsel %vm235, %v227, 0
      %v276 = vsel %vm235, %v228, 0
      %v279 = vsel %vm235, %v230, 0
      %281 = vmatprep.subr.mxu0 %v201
      %282 = vmatpush1.msra.mxu0 %v200
      %283 = vmatprep.subr.mxu0 %v240
      %284 = vmatpush1.msra.mxu0 %v237
      %285 = vmatprep.subr.mxu0 0.0
      %286 = vmatpush1.msra.mxu0 0.0
      %287 = vmatprep.subr.mxu0 0.0
      %288 = vmatpush1.msra.mxu0 0.0
      %289 = vmatprep.subr.mxu0 0.0
      %290 = vmatpush1.msra.mxu0 0.0
      %291 = vmatprep.subr.mxu0 0.0
      %292 = vmatpush1.msra.mxu0 0.0
      %293 = vmatprep.subr.mxu0 0.0
      %294 = vmatpush1.msra.mxu0 0.0
      %295 = vmatprep.subr.mxu0 0.0
      %296 = vmatpush1.msra.mxu0 0.0
      %297 = vmatprep.subr.mxu0 0.0
      %298 = vmatpush1.msra.mxu0 0.0
      %299 = vmatprep.subr.mxu0 0.0
      %300 = vmatpush1.msra.mxu0 0.0
      %301 = vmatprep.subr.mxu0 0.0
      %302 = vmatpush1.msra.mxu0 0.0
      %303 = vmatprep.subr.mxu0 0.0
      %304 = vmatpush1.msra.mxu0 0.0
      %305 = vmatprep.subr.mxu0 0.0
      %306 = vmatpush1.msra.mxu0 0.0
      %307 = vmatprep.subr.mxu0 0.0
      %308 = vmatpush1.msra.mxu0 0.0
      %309 = vmatprep.subr.mxu0 0.0
      %310 = vmatpush1.msra.mxu0 0.0
      %311 = vmatprep.subr.mxu0 0.0
      %312 = vmatpush1.msra.mxu0 0.0
      %313 = vmatprep.subr.mxu0 0.0
      %314 = vmatpush1.msra.mxu0 0.0
      %315 = vmatprep.subr.mxu0 0.0
      %316 = vmatpush1.msra.mxu0 0.0
      %317 = vmatprep.subr.mxu0 0.0
      %318 = vmatpush1.msra.mxu0 0.0
      %319 = vmatprep.subr.mxu0 0.0
      %320 = vmatpush1.msra.mxu0 0.0
      %321 = vmatprep.subr.mxu0 0.0
      %322 = vmatpush1.msra.mxu0 0.0
      %323 = vmatprep.subr.mxu0 0.0
      %324 = vmatpush1.msra.mxu0 0.0
      %325 = vmatprep.subr.mxu0 0.0
      %326 = vmatpush1.msra.mxu0 0.0
      %327 = vmatprep.subr.mxu0 0.0
      %328 = vmatpush1.msra.mxu0 0.0
      %329 = vmatprep.subr.mxu0 0.0
      %330 = vmatpush1.msra.mxu0 0.0
      %331 = vmatprep.subr.mxu0 0.0
      %332 = vmatpush1.msra.mxu0 0.0
      %333 = vmatprep.subr.mxu0 0.0
      %334 = vmatpush1.msra.mxu0 0.0
      %335 = vmatprep.subr.mxu0 0.0
      %336 = vmatpush1.msra.mxu0 0.0
      %337 = vmatprep.subr.mxu0 0.0
      %338 = vmatpush1.msra.mxu0 0.0
      %339 = vmatprep.subr.mxu0 0.0
      %340 = vmatpush1.msra.mxu0 0.0
      %341 = vmatprep.subr.mxu0 0.0
      %342 = vmatpush1.msra.mxu0 0.0
      %343 = vmatprep.subr.mxu0 0.0
      %344 = vmatpush1.msra.mxu0 0.0
      %345 = vmatprep.mubr.f32.mxu0 0.0
      %346 = vmatmul.mubr.f32.gmra.mrb[0].mxu0 %v233
      %v347 = vpop.f32.mrb[0].mxu0
      %v348 = vadd.f32 0.0, %v347
      %v349 = vpop.f32.mrb[0].mxu0
      %v350 = vadd.f32 0.0, %v349
      %351 = vdwg.mxu0
      %352 = vmatprep.subr.mxu0 %v203
      %353 = vmatpush1.msra.mxu0 %v202
      %354 = vmatprep.subr.mxu0 %v246
      %355 = vmatpush1.msra.mxu0 %v243
      %356 = vmatprep.subr.mxu0 0.0
      %357 = vmatpush1.msra.mxu0 0.0
      %358 = vmatprep.subr.mxu0 0.0
      %359 = vmatpush1.msra.mxu0 0.0
      %360 = vmatprep.subr.mxu0 0.0
      %361 = vmatpush1.msra.mxu0 0.0
      %362 = vmatprep.subr.mxu0 0.0
      %363 = vmatpush1.msra.mxu0 0.0
      %364 = vmatprep.subr.mxu0 0.0
      %365 = vmatpush1.msra.mxu0 0.0
      %366 = vmatprep.subr.mxu0 0.0
      %367 = vmatpush1.msra.mxu0 0.0
      %368 = vmatprep.subr.mxu0 0.0
      %369 = vmatpush1.msra.mxu0 0.0
      %370 = vmatprep.subr.mxu0 0.0
      %371 = vmatpush1.msra.mxu0 0.0
      %372 = vmatprep.subr.mxu0 0.0
      %373 = vmatpush1.msra.mxu0 0.0
      %374 = vmatprep.subr.mxu0 0.0
      %375 = vmatpush1.msra.mxu0 0.0
      %376 = vmatprep.subr.mxu0 0.0
      %377 = vmatpush1.msra.mxu0 0.0
      %378 = vmatprep.subr.mxu0 0.0
      %379 = vmatpush1.msra.mxu0 0.0
      %380 = vmatprep.subr.mxu0 0.0
      %381 = vmatpush1.msra.mxu0 0.0
      %382 = vmatprep.subr.mxu0 0.0
      %383 = vmatpush1.msra.mxu0 0.0
      %384 = vmatprep.subr.mxu0 0.0
      %385 = vmatpush1.msra.mxu0 0.0
      %386 = vmatprep.subr.mxu0 0.0
      %387 = vmatpush1.msra.mxu0 0.0
      %388 = vmatprep.subr.mxu0 0.0
      %389 = vmatpush1.msra.mxu0 0.0
      %390 = vmatprep.subr.mxu0 0.0
      %391 = vmatpush1.msra.mxu0 0.0
      %392 = vmatprep.subr.mxu0 0.0
      %393 = vmatpush1.msra.mxu0 0.0
      %394 = vmatprep.subr.mxu0 0.0
      %395 = vmatpush1.msra.mxu0 0.0
      %396 = vmatprep.subr.mxu0 0.0
      %397 = vmatpush1.msra.mxu0 0.0
      %398 = vmatprep.subr.mxu0 0.0
      %399 = vmatpush1.msra.mxu0 0.0
      %400 = vmatprep.subr.mxu0 0.0
      %401 = vmatpush1.msra.mxu0 0.0
      %402 = vmatprep.subr.mxu0 0.0
      %403 = vmatpush1.msra.mxu0 0.0
      %404 = vmatprep.subr.mxu0 0.0
      %405 = vmatpush1.msra.mxu0 0.0
      %406 = vmatprep.subr.mxu0 0.0
      %407 = vmatpush1.msra.mxu0 0.0
      %408 = vmatprep.subr.mxu0 0.0
      %409 = vmatpush1.msra.mxu0 0.0
      %410 = vmatprep.subr.mxu0 0.0
      %411 = vmatpush1.msra.mxu0 0.0
      %412 = vmatprep.subr.mxu0 0.0
      %413 = vmatpush1.msra.mxu0 0.0
      %414 = vmatprep.subr.mxu0 0.0
      %415 = vmatpush1.msra.mxu0 0.0
      %416 = vmatprep.mubr.f32.mxu0 0.0
      %417 = vmatmul.mubr.f32.gmra.mrb[0].mxu0 %v233
      %v418 = vpop.f32.mrb[0].mxu0
      %v419 = vadd.f32 0.0, %v418
      %v420 = vpop.f32.mrb[0].mxu0
      %v421 = vadd.f32 0.0, %v420
      %422 = vdwg.mxu0
      %423 = vmatprep.subr.mxu0 %v205
      %424 = vmatpush1.msra.mxu0 %v204
      %425 = vmatprep.subr.mxu0 %v252
      %426 = vmatpush1.msra.mxu0 %v249
      %427 = vmatprep.subr.mxu0 0.0
      %428 = vmatpush1.msra.mxu0 0.0
      %429 = vmatprep.subr.mxu0 0.0
      %430 = vmatpush1.msra.mxu0 0.0
      %431 = vmatprep.subr.mxu0 0.0
      %432 = vmatpush1.msra.mxu0 0.0
      %433 = vmatprep.subr.mxu0 0.0
      %434 = vmatpush1.msra.mxu0 0.0
      %435 = vmatprep.subr.mxu0 0.0
      %436 = vmatpush1.msra.mxu0 0.0
      %437 = vmatprep.subr.mxu0 0.0
      %438 = vmatpush1.msra.mxu0 0.0
      %439 = vmatprep.subr.mxu0 0.0
      %440 = vmatpush1.msra.mxu0 0.0
      %441 = vmatprep.subr.mxu0 0.0
      %442 = vmatpush1.msra.mxu0 0.0
      %443 = vmatprep.subr.mxu0 0.0
      %444 = vmatpush1.msra.mxu0 0.0
      %445 = vmatprep.subr.mxu0 0.0
      %446 = vmatpush1.msra.mxu0 0.0
      %447 = vmatprep.subr.mxu0 0.0
      %448 = vmatpush1.msra.mxu0 0.0
      %449 = vmatprep.subr.mxu0 0.0
      %450 = vmatpush1.msra.mxu0 0.0
      %451 = vmatprep.subr.mxu0 0.0
      %452 = vmatpush1.msra.mxu0 0.0
      %453 = vmatprep.subr.mxu0 0.0
      %454 = vmatpush1.msra.mxu0 0.0
      %455 = vmatprep.subr.mxu0 0.0
      %456 = vmatpush1.msra.mxu0 0.0
      %457 = vmatprep.subr.mxu0 0.0
      %458 = vmatpush1.msra.mxu0 0.0
      %459 = vmatprep.subr.mxu0 0.0
      %460 = vmatpush1.msra.mxu0 0.0
      %461 = vmatprep.subr.mxu0 0.0
      %462 = vmatpush1.msra.mxu0 0.0
      %463 = vmatprep.subr.mxu0 0.0
      %464 = vmatpush1.msra.mxu0 0.0
      %465 = vmatprep.subr.mxu0 0.0
      %466 = vmatpush1.msra.mxu0 0.0
      %467 = vmatprep.subr.mxu0 0.0
      %468 = vmatpush1.msra.mxu0 0.0
      %469 = vmatprep.subr.mxu0 0.0
      %470 = vmatpush1.msra.mxu0 0.0
      %471 = vmatprep.subr.mxu0 0.0
      %472 = vmatpush1.msra.mxu0 0.0
      %473 = vmatprep.subr.mxu0 0.0
      %474 = vmatpush1.msra.mxu0 0.0
      %475 = vmatprep.subr.mxu0 0.0
      %476 = vmatpush1.msra.mxu0 0.0
      %477 = vmatprep.subr.mxu0 0.0
      %478 = vmatpush1.msra.mxu0 0.0
      %479 = vmatprep.subr.mxu0 0.0
      %480 = vmatpush1.msra.mxu0 0.0
      %481 = vmatprep.subr.mxu0 0.0
      %482 = vmatpush1.msra.mxu0 0.0
      %483 = vmatprep.subr.mxu0 0.0
      %484 = vmatpush1.msra.mxu0 0.0
      %485 = vmatprep.subr.mxu0 0.0
      %486 = vmatpush1.msra.mxu0 0.0
      %487 = vmatprep.mubr.f32.mxu0 0.0
      %488 = vmatmul.mubr.f32.gmra.mrb[0].mxu0 %v233
      %v489 = vpop.f32.mrb[0].mxu0
      %v490 = vadd.f32 0.0, %v489
      %v491 = vpop.f32.mrb[0].mxu0
      %v492 = vadd.f32 0.0, %v491
      %493 = vdwg.mxu0
      %494 = vmatprep.subr.mxu0 %v207
      %495 = vmatpush1.msra.mxu0 %v206
      %496 = vmatprep.subr.mxu0 %v258
      %497 = vmatpush1.msra.mxu0 %v255
      %498 = vmatprep.subr.mxu0 0.0
      %499 = vmatpush1.msra.mxu0 0.0
      %500 = vmatprep.subr.mxu0 0.0
      %501 = vmatpush1.msra.mxu0 0.0
      %502 = vmatprep.subr.mxu0 0.0
      %503 = vmatpush1.msra.mxu0 0.0
      %504 = vmatprep.subr.mxu0 0.0
      %505 = vmatpush1.msra.mxu0 0.0
      %506 = vmatprep.subr.mxu0 0.0
      %507 = vmatpush1.msra.mxu0 0.0
      %508 = vmatprep.subr.mxu0 0.0
      %509 = vmatpush1.msra.mxu0 0.0
      %510 = vmatprep.subr.mxu0 0.0
      %511 = vmatpush1.msra.mxu0 0.0
      %512 = vmatprep.subr.mxu0 0.0
      %513 = vmatpush1.msra.mxu0 0.0
      %514 = vmatprep.subr.mxu0 0.0
      %515 = vmatpush1.msra.mxu0 0.0
      %516 = vmatprep.subr.mxu0 0.0
      %517 = vmatpush1.msra.mxu0 0.0
      %518 = vmatprep.subr.mxu0 0.0
      %519 = vmatpush1.msra.mxu0 0.0
      %520 = vmatprep.subr.mxu0 0.0
      %521 = vmatpush1.msra.mxu0 0.0
      %522 = vmatprep.subr.mxu0 0.0
      %523 = vmatpush1.msra.mxu0 0.0
      %524 = vmatprep.subr.mxu0 0.0
      %525 = vmatpush1.msra.mxu0 0.0
      %526 = vmatprep.subr.mxu0 0.0
      %527 = vmatpush1.msra.mxu0 0.0
      %528 = vmatprep.subr.mxu0 0.0
      %529 = vmatpush1.msra.mxu0 0.0
      %530 = vmatprep.subr.mxu0 0.0
      %531 = vmatpush1.msra.mxu0 0.0
      %532 = vmatprep.subr.mxu0 0.0
      %533 = vmatpush1.msra.mxu0 0.0
      %534 = vmatprep.subr.mxu0 0.0
      %535 = vmatpush1.msra.mxu0 0.0
      %536 = vmatprep.subr.mxu0 0.0
      %537 = vmatpush1.msra.mxu0 0.0
      %538 = vmatprep.subr.mxu0 0.0
      %539 = vmatpush1.msra.mxu0 0.0
      %540 = vmatprep.subr.mxu0 0.0
      %541 = vmatpush1.msra.mxu0 0.0
      %542 = vmatprep.subr.mxu0 0.0
      %543 = vmatpush1.msra.mxu0 0.0
      %544 = vmatprep.subr.mxu0 0.0
      %545 = vmatpush1.msra.mxu0 0.0
      %546 = vmatprep.subr.mxu0 0.0
      %547 = vmatpush1.msra.mxu0 0.0
      %548 = vmatprep.subr.mxu0 0.0
      %549 = vmatpush1.msra.mxu0 0.0
      %550 = vmatprep.subr.mxu0 0.0
      %551 = vmatpush1.msra.mxu0 0.0
      %552 = vmatprep.subr.mxu0 0.0
      %553 = vmatpush1.msra.mxu0 0.0
      %554 = vmatprep.subr.mxu0 0.0
      %555 = vmatpush1.msra.mxu0 0.0
      %556 = vmatprep.subr.mxu0 0.0
      %557 = vmatpush1.msra.mxu0 0.0
      %558 = vmatprep.mubr.f32.mxu0 0.0
      %559 = vmatmul.mubr.f32.gmra.mrb[0].mxu0 %v233
      %v560 = vpop.f32.mrb[0].mxu0
      %v561 = vadd.f32 0.0, %v560
      %v562 = vpop.f32.mrb[0].mxu0
      %v563 = vadd.f32 0.0, %v562
      %564 = vdwg.mxu0
      %565 = vmatprep.subr.mxu0 %v209
      %566 = vmatpush1.msra.mxu0 %v208
      %567 = vmatprep.subr.mxu0 %v264
      %568 = vmatpush1.msra.mxu0 %v261
      %569 = vmatprep.subr.mxu0 0.0
      %570 = vmatpush1.msra.mxu0 0.0
      %571 = vmatprep.subr.mxu0 0.0
      %572 = vmatpush1.msra.mxu0 0.0
      %573 = vmatprep.subr.mxu0 0.0
      %574 = vmatpush1.msra.mxu0 0.0
      %575 = vmatprep.subr.mxu0 0.0
      %576 = vmatpush1.msra.mxu0 0.0
      %577 = vmatprep.subr.mxu0 0.0
      %578 = vmatpush1.msra.mxu0 0.0
      %579 = vmatprep.subr.mxu0 0.0
      %580 = vmatpush1.msra.mxu0 0.0
      %581 = vmatprep.subr.mxu0 0.0
      %582 = vmatpush1.msra.mxu0 0.0
      %583 = vmatprep.subr.mxu0 0.0
      %584 = vmatpush1.msra.mxu0 0.0
      %585 = vmatprep.subr.mxu0 0.0
      %586 = vmatpush1.msra.mxu0 0.0
      %587 = vmatprep.subr.mxu0 0.0
      %588 = vmatpush1.msra.mxu0 0.0
      %589 = vmatprep.subr.mxu0 0.0
      %590 = vmatpush1.msra.mxu0 0.0
      %591 = vmatprep.subr.mxu0 0.0
      %592 = vmatpush1.msra.mxu0 0.0
      %593 = vmatprep.subr.mxu0 0.0
      %594 = vmatpush1.msra.mxu0 0.0
      %595 = vmatprep.subr.mxu0 0.0
      %596 = vmatpush1.msra.mxu0 0.0
      %597 = vmatprep.subr.mxu0 0.0
      %598 = vmatpush1.msra.mxu0 0.0
      %599 = vmatprep.subr.mxu0 0.0
      %600 = vmatpush1.msra.mxu0 0.0
      %601 = vmatprep.subr.mxu0 0.0
      %602 = vmatpush1.msra.mxu0 0.0
      %603 = vmatprep.subr.mxu0 0.0
      %604 = vmatpush1.msra.mxu0 0.0
      %605 = vmatprep.subr.mxu0 0.0
      %606 = vmatpush1.msra.mxu0 0.0
      %607 = vmatprep.subr.mxu0 0.0
      %608 = vmatpush1.msra.mxu0 0.0
      %609 = vmatprep.subr.mxu0 0.0
      %610 = vmatpush1.msra.mxu0 0.0
      %611 = vmatprep.subr.mxu0 0.0
      %612 = vmatpush1.msra.mxu0 0.0
      %613 = vmatprep.subr.mxu0 0.0
      %614 = vmatpush1.msra.mxu0 0.0
      %615 = vmatprep.subr.mxu0 0.0
      %616 = vmatpush1.msra.mxu0 0.0
      %617 = vmatprep.subr.mxu0 0.0
      %618 = vmatpush1.msra.mxu0 0.0
      %619 = vmatprep.subr.mxu0 0.0
      %620 = vmatpush1.msra.mxu0 0.0
      %621 = vmatprep.subr.mxu0 0.0
      %622 = vmatpush1.msra.mxu0 0.0
      %623 = vmatprep.subr.mxu0 0.0
      %624 = vmatpush1.msra.mxu0 0.0
      %625 = vmatprep.subr.mxu0 0.0
      %626 = vmatpush1.msra.mxu0 0.0
      %627 = vmatprep.subr.mxu0 0.0
      %628 = vmatpush1.msra.mxu0 0.0
      %629 = vmatprep.mubr.f32.mxu0 0.0
      %630 = vmatmul.mubr.f32.gmra.mrb[0].mxu0 %v233
      %v631 = vpop.f32.mrb[0].mxu0
      %v632 = vadd.f32 0.0, %v631
      %v633 = vpop.f32.mrb[0].mxu0
      %v634 = vadd.f32 0.0, %v633
      %635 = vdwg.mxu0
      %636 = vmatprep.subr.mxu0 %v211
      %637 = vmatpush1.msra.mxu0 %v210
      %638 = vmatprep.subr.mxu0 %v270
      %639 = vmatpush1.msra.mxu0 %v267
      %640 = vmatprep.subr.mxu0 0.0
      %641 = vmatpush1.msra.mxu0 0.0
      %642 = vmatprep.subr.mxu0 0.0
      %643 = vmatpush1.msra.mxu0 0.0
      %644 = vmatprep.subr.mxu0 0.0
      %645 = vmatpush1.msra.mxu0 0.0
      %646 = vmatprep.subr.mxu0 0.0
      %647 = vmatpush1.msra.mxu0 0.0
      %648 = vmatprep.subr.mxu0 0.0
      %649 = vmatpush1.msra.mxu0 0.0
      %650 = vmatprep.subr.mxu0 0.0
      %651 = vmatpush1.msra.mxu0 0.0
      %652 = vmatprep.subr.mxu0 0.0
      %653 = vmatpush1.msra.mxu0 0.0
      %654 = vmatprep.subr.mxu0 0.0
      %655 = vmatpush1.msra.mxu0 0.0
      %656 = vmatprep.subr.mxu0 0.0
      %657 = vmatpush1.msra.mxu0 0.0
      %658 = vmatprep.subr.mxu0 0.0
      %659 = vmatpush1.msra.mxu0 0.0
      %660 = vmatprep.subr.mxu0 0.0
      %661 = vmatpush1.msra.mxu0 0.0
      %662 = vmatprep.subr.mxu0 0.0
      %663 = vmatpush1.msra.mxu0 0.0
      %664 = vmatprep.subr.mxu0 0.0
      %665 = vmatpush1.msra.mxu0 0.0
      %666 = vmatprep.subr.mxu0 0.0
      %667 = vmatpush1.msra.mxu0 0.0
      %668 = vmatprep.subr.mxu0 0.0
      %669 = vmatpush1.msra.mxu0 0.0
      %670 = vmatprep.subr.mxu0 0.0
      %671 = vmatpush1.msra.mxu0 0.0
      %672 = vmatprep.subr.mxu0 0.0
      %673 = vmatpush1.msra.mxu0 0.0
      %674 = vmatprep.subr.mxu0 0.0
      %675 = vmatpush1.msra.mxu0 0.0
      %676 = vmatprep.subr.mxu0 0.0
      %677 = vmatpush1.msra.mxu0 0.0
      %678 = vmatprep.subr.mxu0 0.0
      %679 = vmatpush1.msra.mxu0 0.0
      %680 = vmatprep.subr.mxu0 0.0
      %681 = vmatpush1.msra.mxu0 0.0
      %682 = vmatprep.subr.mxu0 0.0
      %683 = vmatpush1.msra.mxu0 0.0
      %684 = vmatprep.subr.mxu0 0.0
      %685 = vmatpush1.msra.mxu0 0.0
      %686 = vmatprep.subr.mxu0 0.0
      %687 = vmatpush1.msra.mxu0 0.0
      %688 = vmatprep.subr.mxu0 0.0
      %689 = vmatpush1.msra.mxu0 0.0
      %690 = vmatprep.subr.mxu0 0.0
      %691 = vmatpush1.msra.mxu0 0.0
      %692 = vmatprep.subr.mxu0 0.0
      %693 = vmatpush1.msra.mxu0 0.0
      %694 = vmatprep.subr.mxu0 0.0
      %695 = vmatpush1.msra.mxu0 0.0
      %696 = vmatprep.subr.mxu0 0.0
      %697 = vmatpush1.msra.mxu0 0.0
      %698 = vmatprep.subr.mxu0 0.0
      %699 = vmatpush1.msra.mxu0 0.0
      %700 = vmatprep.mubr.f32.mxu0 0.0
      %701 = vmatmul.mubr.f32.gmra.mrb[0].mxu0 %v233
      %v702 = vpop.f32.mrb[0].mxu0
      %v703 = vadd.f32 0.0, %v702
      %v704 = vpop.f32.mrb[0].mxu0
      %v705 = vadd.f32 0.0, %v704
      %706 = vdwg.mxu0
      %707 = vmatprep.subr.mxu0 %v213
      %708 = vmatpush1.msra.mxu0 %v212
      %709 = vmatprep.subr.mxu0 %v276
      %710 = vmatpush1.msra.mxu0 %v273
      %711 = vmatprep.subr.mxu0 0.0
      %712 = vmatpush1.msra.mxu0 0.0
      %713 = vmatprep.subr.mxu0 0.0
      %714 = vmatpush1.msra.mxu0 0.0
      %715 = vmatprep.subr.mxu0 0.0
      %716 = vmatpush1.msra.mxu0 0.0
      %717 = vmatprep.subr.mxu0 0.0
      %718 = vmatpush1.msra.mxu0 0.0
      %719 = vmatprep.subr.mxu0 0.0
      %720 = vmatpush1.msra.mxu0 0.0
      %721 = vmatprep.subr.mxu0 0.0
      %722 = vmatpush1.msra.mxu0 0.0
      %723 = vmatprep.subr.mxu0 0.0
      %724 = vmatpush1.msra.mxu0 0.0
      %725 = vmatprep.subr.mxu0 0.0
      %726 = vmatpush1.msra.mxu0 0.0
      %727 = vmatprep.subr.mxu0 0.0
      %728 = vmatpush1.msra.mxu0 0.0
      %729 = vmatprep.subr.mxu0 0.0
      %730 = vmatpush1.msra.mxu0 0.0
      %731 = vmatprep.subr.mxu0 0.0
      %732 = vmatpush1.msra.mxu0 0.0
      %733 = vmatprep.subr.mxu0 0.0
      %734 = vmatpush1.msra.mxu0 0.0
      %735 = vmatprep.subr.mxu0 0.0
      %736 = vmatpush1.msra.mxu0 0.0
      %737 = vmatprep.subr.mxu0 0.0
      %738 = vmatpush1.msra.mxu0 0.0
      %739 = vmatprep.subr.mxu0 0.0
      %740 = vmatpush1.msra.mxu0 0.0
      %741 = vmatprep.subr.mxu0 0.0
      %742 = vmatpush1.msra.mxu0 0.0
      %743 = vmatprep.subr.mxu0 0.0
      %744 = vmatpush1.msra.mxu0 0.0
      %745 = vmatprep.subr.mxu0 0.0
      %746 = vmatpush1.msra.mxu0 0.0
      %747 = vmatprep.subr.mxu0 0.0
      %748 = vmatpush1.msra.mxu0 0.0
      %749 = vmatprep.subr.mxu0 0.0
      %750 = vmatpush1.msra.mxu0 0.0
      %751 = vmatprep.subr.mxu0 0.0
      %752 = vmatpush1.msra.mxu0 0.0
      %753 = vmatprep.subr.mxu0 0.0
      %754 = vmatpush1.msra.mxu0 0.0
      %755 = vmatprep.subr.mxu0 0.0
      %756 = vmatpush1.msra.mxu0 0.0
      %757 = vmatprep.subr.mxu0 0.0
      %758 = vmatpush1.msra.mxu0 0.0
      %759 = vmatprep.subr.mxu0 0.0
      %760 = vmatpush1.msra.mxu0 0.0
      %761 = vmatprep.subr.mxu0 0.0
      %762 = vmatpush1.msra.mxu0 0.0
      %763 = vmatprep.subr.mxu0 0.0
      %764 = vmatpush1.msra.mxu0 0.0
      %765 = vmatprep.subr.mxu0 0.0
      %766 = vmatpush1.msra.mxu0 0.0
      %767 = vmatprep.subr.mxu0 0.0
      %768 = vmatpush1.msra.mxu0 0.0
      %769 = vmatprep.subr.mxu0 0.0
      %770 = vmatpush1.msra.mxu0 0.0
      %771 = vmatprep.mubr.f32.mxu0 0.0
      %772 = vmatmul.mubr.f32.gmra.mrb[0].mxu0 %v233
      %v773 = vpop.f32.mrb[0].mxu0
      %v774 = vadd.f32 0.0, %v773
      %v775 = vpop.f32.mrb[0].mxu0
      %v776 = vadd.f32 0.0, %v775
      %777 = vdwg.mxu0
      %778 = vmatprep.subr.mxu0 0.0
      %779 = vmatpush1.msra.mxu0 %v229
      %780 = vmatprep.subr.mxu0 0.0
      %781 = vmatpush1.msra.mxu0 %v279
      %782 = vmatprep.subr.mxu0 0.0
      %783 = vmatpush1.msra.mxu0 0.0
      %784 = vmatprep.subr.mxu0 0.0
      %785 = vmatpush1.msra.mxu0 0.0
      %786 = vmatprep.subr.mxu0 0.0
      %787 = vmatpush1.msra.mxu0 0.0
      %788 = vmatprep.subr.mxu0 0.0
      %789 = vmatpush1.msra.mxu0 0.0
      %790 = vmatprep.subr.mxu0 0.0
      %791 = vmatpush1.msra.mxu0 0.0
      %792 = vmatprep.subr.mxu0 0.0
      %793 = vmatpush1.msra.mxu0 0.0
      %794 = vmatprep.subr.mxu0 0.0
      %795 = vmatpush1.msra.mxu0 0.0
      %796 = vmatprep.subr.mxu0 0.0
      %797 = vmatpush1.msra.mxu0 0.0
      %798 = vmatprep.subr.mxu0 0.0
      %799 = vmatpush1.msra.mxu0 0.0
      %800 = vmatprep.subr.mxu0 0.0
      %801 = vmatpush1.msra.mxu0 0.0
      %802 = vmatprep.subr.mxu0 0.0
      %803 = vmatpush1.msra.mxu0 0.0
      %804 = vmatprep.subr.mxu0 0.0
      %805 = vmatpush1.msra.mxu0 0.0
      %806 = vmatprep.subr.mxu0 0.0
      %807 = vmatpush1.msra.mxu0 0.0
      %808 = vmatprep.subr.mxu0 0.0
      %809 = vmatpush1.msra.mxu0 0.0
      %810 = vmatprep.subr.mxu0 0.0
      %811 = vmatpush1.msra.mxu0 0.0
      %812 = vmatprep.subr.mxu0 0.0
      %813 = vmatpush1.msra.mxu0 0.0
      %814 = vmatprep.subr.mxu0 0.0
      %815 = vmatpush1.msra.mxu0 0.0
      %816 = vmatprep.subr.mxu0 0.0
      %817 = vmatpush1.msra.mxu0 0.0
      %818 = vmatprep.subr.mxu0 0.0
      %819 = vmatpush1.msra.mxu0 0.0
      %820 = vmatprep.subr.mxu0 0.0
      %821 = vmatpush1.msra.mxu0 0.0
      %822 = vmatprep.subr.mxu0 0.0
      %823 = vmatpush1.msra.mxu0 0.0
      %824 = vmatprep.subr.mxu0 0.0
      %825 = vmatpush1.msra.mxu0 0.0
      %826 = vmatprep.subr.mxu0 0.0
      %827 = vmatpush1.msra.mxu0 0.0
      %828 = vmatprep.subr.mxu0 0.0
      %829 = vmatpush1.msra.mxu0 0.0
      %830 = vmatprep.subr.mxu0 0.0
      %831 = vmatpush1.msra.mxu0 0.0
      %832 = vmatprep.subr.mxu0 0.0
      %833 = vmatpush1.msra.mxu0 0.0
      %834 = vmatprep.subr.mxu0 0.0
      %835 = vmatpush1.msra.mxu0 0.0
      %836 = vmatprep.subr.mxu0 0.0
      %837 = vmatpush1.msra.mxu0 0.0
      %838 = vmatprep.subr.mxu0 0.0
      %839 = vmatpush1.msra.mxu0 0.0
      %840 = vmatprep.subr.mxu0 0.0
      %841 = vmatpush1.msra.mxu0 0.0
      %842 = vmatprep.mubr.f32.mxu0 0.0
      %843 = vmatmul.mubr.f32.gmra.mrb[0].mxu0 %v233
      %v844 = vpop.f32.mrb[0].mxu0
      %v845 = vadd.f32 0.0, %v844
      %v846 = vpop.f32.mrb[0].mxu0
      %847 = vdwg.mxu0
      %v849 = vsel %vm231, %v197, 0
      %v852 = vsel %vm235, %v214, 0
      %854 = vmatprep.subr.mxu0 %v200
      %855 = vmatpush1.msra.mxu0 %v199
      %856 = vmatprep.subr.mxu0 %v237
      %857 = vmatpush1.msra.mxu0 %v852
      %858 = vmatprep.subr.mxu0 0.0
      %859 = vmatpush1.msra.mxu0 0.0
      %860 = vmatprep.subr.mxu0 0.0
      %861 = vmatpush1.msra.mxu0 0.0
      %862 = vmatprep.subr.mxu0 0.0
      %863 = vmatpush1.msra.mxu0 0.0
      %864 = vmatprep.subr.mxu0 0.0
      %865 = vmatpush1.msra.mxu0 0.0
      %866 = vmatprep.subr.mxu0 0.0
      %867 = vmatpush1.msra.mxu0 0.0
      %868 = vmatprep.subr.mxu0 0.0
      %869 = vmatpush1.msra.mxu0 0.0
      %870 = vmatprep.subr.mxu0 0.0
      %871 = vmatpush1.msra.mxu0 0.0
      %872 = vmatprep.subr.mxu0 0.0
      %873 = vmatpush1.msra.mxu0 0.0
      %874 = vmatprep.subr.mxu0 0.0
      %875 = vmatpush1.msra.mxu0 0.0
      %876 = vmatprep.subr.mxu0 0.0
      %877 = vmatpush1.msra.mxu0 0.0
      %878 = vmatprep.subr.mxu0 0.0
      %879 = vmatpush1.msra.mxu0 0.0
      %880 = vmatprep.subr.mxu0 0.0
      %881 = vmatpush1.msra.mxu0 0.0
      %882 = vmatprep.subr.mxu0 0.0
      %883 = vmatpush1.msra.mxu0 0.0
      %884 = vmatprep.subr.mxu0 0.0
      %885 = vmatpush1.msra.mxu0 0.0
      %886 = vmatprep.subr.mxu0 0.0
      %887 = vmatpush1.msra.mxu0 0.0
      %888 = vmatprep.subr.mxu0 0.0
      %889 = vmatpush1.msra.mxu0 0.0
      %890 = vmatprep.subr.mxu0 0.0
      %891 = vmatpush1.msra.mxu0 0.0
      %892 = vmatprep.subr.mxu0 0.0
      %893 = vmatpush1.msra.mxu0 0.0
      %894 = vmatprep.subr.mxu0 0.0
      %895 = vmatpush1.msra.mxu0 0.0
      %896 = vmatprep.subr.mxu0 0.0
      %897 = vmatpush1.msra.mxu0 0.0
      %898 = vmatprep.subr.mxu0 0.0
      %899 = vmatpush1.msra.mxu0 0.0
      %900 = vmatprep.subr.mxu0 0.0
      %901 = vmatpush1.msra.mxu0 0.0
      %902 = vmatprep.subr.mxu0 0.0
      %903 = vmatpush1.msra.mxu0 0.0
      %904 = vmatprep.subr.mxu0 0.0
      %905 = vmatpush1.msra.mxu0 0.0
      %906 = vmatprep.subr.mxu0 0.0
      %907 = vmatpush1.msra.mxu0 0.0
      %908 = vmatprep.subr.mxu0 0.0
      %909 = vmatpush1.msra.mxu0 0.0
      %910 = vmatprep.subr.mxu0 0.0
      %911 = vmatpush1.msra.mxu0 0.0
      %912 = vmatprep.subr.mxu0 0.0
      %913 = vmatpush1.msra.mxu0 0.0
      %914 = vmatprep.subr.mxu0 0.0
      %915 = vmatpush1.msra.mxu0 0.0
      %916 = vmatprep.subr.mxu0 0.0
      %917 = vmatpush1.msra.mxu0 0.0
      %918 = vmatprep.mubr.f32.mxu0 0.0
      %919 = vmatmul.mubr.f32.gmra.mrb[0].mxu0 %v849
      %v920 = vpop.f32.mrb[0].mxu0
      %v921 = vadd.f32 %v348, %v920
      %v922 = vpop.f32.mrb[0].mxu0
      %v923 = vadd.f32 %v350, %v922
      %924 = vdwg.mxu0
      %925 = vmatprep.subr.mxu0 %v202
      %926 = vmatpush1.msra.mxu0 %v201
      %927 = vmatprep.subr.mxu0 %v243
      %928 = vmatpush1.msra.mxu0 %v240
      %929 = vmatprep.subr.mxu0 0.0
      %930 = vmatpush1.msra.mxu0 0.0
      %931 = vmatprep.subr.mxu0 0.0
      %932 = vmatpush1.msra.mxu0 0.0
      %933 = vmatprep.subr.mxu0 0.0
      %934 = vmatpush1.msra.mxu0 0.0
      %935 = vmatprep.subr.mxu0 0.0
      %936 = vmatpush1.msra.mxu0 0.0
      %937 = vmatprep.subr.mxu0 0.0
      %938 = vmatpush1.msra.mxu0 0.0
      %939 = vmatprep.subr.mxu0 0.0
      %940 = vmatpush1.msra.mxu0 0.0
      %941 = vmatprep.subr.mxu0 0.0
      %942 = vmatpush1.msra.mxu0 0.0
      %943 = vmatprep.subr.mxu0 0.0
      %944 = vmatpush1.msra.mxu0 0.0
      %945 = vmatprep.subr.mxu0 0.0
      %946 = vmatpush1.msra.mxu0 0.0
      %947 = vmatprep.subr.mxu0 0.0
      %948 = vmatpush1.msra.mxu0 0.0
      %949 = vmatprep.subr.mxu0 0.0
      %950 = vmatpush1.msra.mxu0 0.0
      %951 = vmatprep.subr.mxu0 0.0
      %952 = vmatpush1.msra.mxu0 0.0
      %953 = vmatprep.subr.mxu0 0.0
      %954 = vmatpush1.msra.mxu0 0.0
      %955 = vmatprep.subr.mxu0 0.0
      %956 = vmatpush1.msra.mxu0 0.0
      %957 = vmatprep.subr.mxu0 0.0
      %958 = vmatpush1.msra.mxu0 0.0
      %959 = vmatprep.subr.mxu0 0.0
      %960 = vmatpush1.msra.mxu0 0.0
      %961 = vmatprep.subr.mxu0 0.0
      %962 = vmatpush1.msra.mxu0 0.0
      %963 = vmatprep.subr.mxu0 0.0
      %964 = vmatpush1.msra.mxu0 0.0
      %965 = vmatprep.subr.mxu0 0.0
      %966 = vmatpush1.msra.mxu0 0.0
      %967 = vmatprep.subr.mxu0 0.0
      %968 = vmatpush1.msra.mxu0 0.0
      %969 = vmatprep.subr.mxu0 0.0
      %970 = vmatpush1.msra.mxu0 0.0
      %971 = vmatprep.subr.mxu0 0.0
      %972 = vmatpush1.msra.mxu0 0.0
      %973 = vmatprep.subr.mxu0 0.0
      %974 = vmatpush1.msra.mxu0 0.0
      %975 = vmatprep.subr.mxu0 0.0
      %976 = vmatpush1.msra.mxu0 0.0
      %977 = vmatprep.subr.mxu0 0.0
      %978 = vmatpush1.msra.mxu0 0.0
      %979 = vmatprep.subr.mxu0 0.0
      %980 = vmatpush1.msra.mxu0 0.0
      %981 = vmatprep.subr.mxu0 0.0
      %982 = vmatpush1.msra.mxu0 0.0
      %983 = vmatprep.subr.mxu0 0.0
      %984 = vmatpush1.msra.mxu0 0.0
      %985 = vmatprep.subr.mxu0 0.0
      %986 = vmatpush1.msra.mxu0 0.0
      %987 = vmatprep.subr.mxu0 0.0
      %988 = vmatpush1.msra.mxu0 0.0
      %989 = vmatprep.mubr.f32.mxu0 0.0
      %990 = vmatmul.mubr.f32.gmra.mrb[0].mxu0 %v849
      %v991 = vpop.f32.mrb[0].mxu0
      %v992 = vadd.f32 %v419, %v991
      %v993 = vpop.f32.mrb[0].mxu0
      %v994 = vadd.f32 %v421, %v993
      %995 = vdwg.mxu0
      %996 = vmatprep.subr.mxu0 %v204
      %997 = vmatpush1.msra.mxu0 %v203
      %998 = vmatprep.subr.mxu0 %v249
      %999 = vmatpush1.msra.mxu0 %v246
      %1000 = vmatprep.subr.mxu0 0.0
      %1001 = vmatpush1.msra.mxu0 0.0
      %1002 = vmatprep.subr.mxu0 0.0
      %1003 = vmatpush1.msra.mxu0 0.0
      %1004 = vmatprep.subr.mxu0 0.0
      %1005 = vmatpush1.msra.mxu0 0.0
      %1006 = vmatprep.subr.mxu0 0.0
      %1007 = vmatpush1.msra.mxu0 0.0
      %1008 = vmatprep.subr.mxu0 0.0
      %1009 = vmatpush1.msra.mxu0 0.0
      %1010 = vmatprep.subr.mxu0 0.0
      %1011 = vmatpush1.msra.mxu0 0.0
      %1012 = vmatprep.subr.mxu0 0.0
      %1013 = vmatpush1.msra.mxu0 0.0
      %1014 = vmatprep.subr.mxu0 0.0
      %1015 = vmatpush1.msra.mxu0 0.0
      %1016 = vmatprep.subr.mxu0 0.0
      %1017 = vmatpush1.msra.mxu0 0.0
      %1018 = vmatprep.subr.mxu0 0.0
      %1019 = vmatpush1.msra.mxu0 0.0
      %1020 = vmatprep.subr.mxu0 0.0
      %1021 = vmatpush1.msra.mxu0 0.0
      %1022 = vmatprep.subr.mxu0 0.0
      %1023 = vmatpush1.msra.mxu0 0.0
      %1024 = vmatprep.subr.mxu0 0.0
      %1025 = vmatpush1.msra.mxu0 0.0
      %1026 = vmatprep.subr.mxu0 0.0
      %1027 = vmatpush1.msra.mxu0 0.0
      %1028 = vmatprep.subr.mxu0 0.0
      %1029 = vmatpush1.msra.mxu0 0.0
      %1030 = vmatprep.subr.mxu0 0.0
      %1031 = vmatpush1.msra.mxu0 0.0
      %1032 = vmatprep.subr.mxu0 0.0
      %1033 = vmatpush1.msra.mxu0 0.0
      %1034 = vmatprep.subr.mxu0 0.0
      %1035 = vmatpush1.msra.mxu0 0.0
      %1036 = vmatprep.subr.mxu0 0.0
      %1037 = vmatpush1.msra.mxu0 0.0
      %1038 = vmatprep.subr.mxu0 0.0
      %1039 = vmatpush1.msra.mxu0 0.0
      %1040 = vmatprep.subr.mxu0 0.0
      %1041 = vmatpush1.msra.mxu0 0.0
      %1042 = vmatprep.subr.mxu0 0.0
      %1043 = vmatpush1.msra.mxu0 0.0
      %1044 = vmatprep.subr.mxu0 0.0
      %1045 = vmatpush1.msra.mxu0 0.0
      %1046 = vmatprep.subr.mxu0 0.0
      %1047 = vmatpush1.msra.mxu0 0.0
      %1048 = vmatprep.subr.mxu0 0.0
      %1049 = vmatpush1.msra.mxu0 0.0
      %1050 = vmatprep.subr.mxu0 0.0
      %1051 = vmatpush1.msra.mxu0 0.0
      %1052 = vmatprep.subr.mxu0 0.0
      %1053 = vmatpush1.msra.mxu0 0.0
      %1054 = vmatprep.subr.mxu0 0.0
      %1055 = vmatpush1.msra.mxu0 0.0
      %1056 = vmatprep.subr.mxu0 0.0
      %1057 = vmatpush1.msra.mxu0 0.0
      %1058 = vmatprep.subr.mxu0 0.0
      %1059 = vmatpush1.msra.mxu0 0.0
      %1060 = vmatprep.mubr.f32.mxu0 0.0
      %1061 = vmatmul.mubr.f32.gmra.mrb[0].mxu0 %v849
      %v1062 = vpop.f32.mrb[0].mxu0
      %v1063 = vadd.f32 %v490, %v1062
      %v1064 = vpop.f32.mrb[0].mxu0
      %v1065 = vadd.f32 %v492, %v1064
      %1066 = vdwg.mxu0
      %1067 = vmatprep.subr.mxu0 %v206
      %1068 = vmatpush1.msra.mxu0 %v205
      %1069 = vmatprep.subr.mxu0 %v255
      %1070 = vmatpush1.msra.mxu0 %v252
      %1071 = vmatprep.subr.mxu0 0.0
      %1072 = vmatpush1.msra.mxu0 0.0
      %1073 = vmatprep.subr.mxu0 0.0
      %1074 = vmatpush1.msra.mxu0 0.0
      %1075 = vmatprep.subr.mxu0 0.0
      %1076 = vmatpush1.msra.mxu0 0.0
      %1077 = vmatprep.subr.mxu0 0.0
      %1078 = vmatpush1.msra.mxu0 0.0
      %1079 = vmatprep.subr.mxu0 0.0
      %1080 = vmatpush1.msra.mxu0 0.0
      %1081 = vmatprep.subr.mxu0 0.0
      %1082 = vmatpush1.msra.mxu0 0.0
      %1083 = vmatprep.subr.mxu0 0.0
      %1084 = vmatpush1.msra.mxu0 0.0
      %1085 = vmatprep.subr.mxu0 0.0
      %1086 = vmatpush1.msra.mxu0 0.0
      %1087 = vmatprep.subr.mxu0 0.0
      %1088 = vmatpush1.msra.mxu0 0.0
      %1089 = vmatprep.subr.mxu0 0.0
      %1090 = vmatpush1.msra.mxu0 0.0
      %1091 = vmatprep.subr.mxu0 0.0
      %1092 = vmatpush1.msra.mxu0 0.0
      %1093 = vmatprep.subr.mxu0 0.0
      %1094 = vmatpush1.msra.mxu0 0.0
      %1095 = vmatprep.subr.mxu0 0.0
      %1096 = vmatpush1.msra.mxu0 0.0
      %1097 = vmatprep.subr.mxu0 0.0
      %1098 = vmatpush1.msra.mxu0 0.0
      %1099 = vmatprep.subr.mxu0 0.0
      %1100 = vmatpush1.msra.mxu0 0.0
      %1101 = vmatprep.subr.mxu0 0.0
      %1102 = vmatpush1.msra.mxu0 0.0
      %1103 = vmatprep.subr.mxu0 0.0
      %1104 = vmatpush1.msra.mxu0 0.0
      %1105 = vmatprep.subr.mxu0 0.0
      %1106 = vmatpush1.msra.mxu0 0.0
      %1107 = vmatprep.subr.mxu0 0.0
      %1108 = vmatpush1.msra.mxu0 0.0
      %1109 = vmatprep.subr.mxu0 0.0
      %1110 = vmatpush1.msra.mxu0 0.0
      %1111 = vmatprep.subr.mxu0 0.0
      %1112 = vmatpush1.msra.mxu0 0.0
      %1113 = vmatprep.subr.mxu0 0.0
      %1114 = vmatpush1.msra.mxu0 0.0
      %1115 = vmatprep.subr.mxu0 0.0
      %1116 = vmatpush1.msra.mxu0 0.0
      %1117 = vmatprep.subr.mxu0 0.0
      %1118 = vmatpush1.msra.mxu0 0.0
      %1119 = vmatprep.subr.mxu0 0.0
      %1120 = vmatpush1.msra.mxu0 0.0
      %1121 = vmatprep.subr.mxu0 0.0
      %1122 = vmatpush1.msra.mxu0 0.0
      %1123 = vmatprep.subr.mxu0 0.0
      %1124 = vmatpush1.msra.mxu0 0.0
      %1125 = vmatprep.subr.mxu0 0.0
      %1126 = vmatpush1.msra.mxu0 0.0
      %1127 = vmatprep.subr.mxu0 0.0
      %1128 = vmatpush1.msra.mxu0 0.0
      %1129 = vmatprep.subr.mxu0 0.0
      %1130 = vmatpush1.msra.mxu0 0.0
      %1131 = vmatprep.mubr.f32.mxu0 0.0
      %1132 = vmatmul.mubr.f32.gmra.mrb[0].mxu0 %v849
      %v1133 = vpop.f32.mrb[0].mxu0
      %v1134 = vadd.f32 %v561, %v1133
      %v1135 = vpop.f32.mrb[0].mxu0
      %v1136 = vadd.f32 %v563, %v1135
      %1137 = vdwg.mxu0
      %1138 = vmatprep.subr.mxu0 %v208
      %1139 = vmatpush1.msra.mxu0 %v207
      %1140 = vmatprep.subr.mxu0 %v261
      %1141 = vmatpush1.msra.mxu0 %v258
      %1142 = vmatprep.subr.mxu0 0.0
      %1143 = vmatpush1.msra.mxu0 0.0
      %1144 = vmatprep.subr.mxu0 0.0
      %1145 = vmatpush1.msra.mxu0 0.0
      %1146 = vmatprep.subr.mxu0 0.0
      %1147 = vmatpush1.msra.mxu0 0.0
      %1148 = vmatprep.subr.mxu0 0.0
      %1149 = vmatpush1.msra.mxu0 0.0
      %1150 = vmatprep.subr.mxu0 0.0
      %1151 = vmatpush1.msra.mxu0 0.0
      %1152 = vmatprep.subr.mxu0 0.0
      %1153 = vmatpush1.msra.mxu0 0.0
      %1154 = vmatprep.subr.mxu0 0.0
      %1155 = vmatpush1.msra.mxu0 0.0
      %1156 = vmatprep.subr.mxu0 0.0
      %1157 = vmatpush1.msra.mxu0 0.0
      %1158 = vmatprep.subr.mxu0 0.0
      %1159 = vmatpush1.msra.mxu0 0.0
      %1160 = vmatprep.subr.mxu0 0.0
      %1161 = vmatpush1.msra.mxu0 0.0
      %1162 = vmatprep.subr.mxu0 0.0
      %1163 = vmatpush1.msra.mxu0 0.0
      %1164 = vmatprep.subr.mxu0 0.0
      %1165 = vmatpush1.msra.mxu0 0.0
      %1166 = vmatprep.subr.mxu0 0.0
      %1167 = vmatpush1.msra.mxu0 0.0
      %1168 = vmatprep.subr.mxu0 0.0
      %1169 = vmatpush1.msra.mxu0 0.0
      %1170 = vmatprep.subr.mxu0 0.0
      %1171 = vmatpush1.msra.mxu0 0.0
      %1172 = vmatprep.subr.mxu0 0.0
      %1173 = vmatpush1.msra.mxu0 0.0
      %1174 = vmatprep.subr.mxu0 0.0
      %1175 = vmatpush1.msra.mxu0 0.0
      %1176 = vmatprep.subr.mxu0 0.0
      %1177 = vmatpush1.msra.mxu0 0.0
      %1178 = vmatprep.subr.mxu0 0.0
      %1179 = vmatpush1.msra.mxu0 0.0
      %1180 = vmatprep.subr.mxu0 0.0
      %1181 = vmatpush1.msra.mxu0 0.0
      %1182 = vmatprep.subr.mxu0 0.0
      %1183 = vmatpush1.msra.mxu0 0.0
      %1184 = vmatprep.subr.mxu0 0.0
      %1185 = vmatpush1.msra.mxu0 0.0
      %1186 = vmatprep.subr.mxu0 0.0
      %1187 = vmatpush1.msra.mxu0 0.0
      %1188 = vmatprep.subr.mxu0 0.0
      %1189 = vmatpush1.msra.mxu0 0.0
      %1190 = vmatprep.subr.mxu0 0.0
      %1191 = vmatpush1.msra.mxu0 0.0
      %1192 = vmatprep.subr.mxu0 0.0
      %1193 = vmatpush1.msra.mxu0 0.0
      %1194 = vmatprep.subr.mxu0 0.0
      %1195 = vmatpush1.msra.mxu0 0.0
      %1196 = vmatprep.subr.mxu0 0.0
      %1197 = vmatpush1.msra.mxu0 0.0
      %1198 = vmatprep.subr.mxu0 0.0
      %1199 = vmatpush1.msra.mxu0 0.0
      %1200 = vmatprep.subr.mxu0 0.0
      %1201 = vmatpush1.msra.mxu0 0.0
      %1202 = vmatprep.mubr.f32.mxu0 0.0
      %1203 = vmatmul.mubr.f32.gmra.mrb[0].mxu0 %v849
      %v1204 = vpop.f32.mrb[0].mxu0
      %v1205 = vadd.f32 %v632, %v1204
      %v1206 = vpop.f32.mrb[0].mxu0
      %v1207 = vadd.f32 %v634, %v1206
      %1208 = vdwg.mxu0
      %1209 = vmatprep.subr.mxu0 %v210
      %1210 = vmatpush1.msra.mxu0 %v209
      %1211 = vmatprep.subr.mxu0 %v267
      %1212 = vmatpush1.msra.mxu0 %v264
      %1213 = vmatprep.subr.mxu0 0.0
      %1214 = vmatpush1.msra.mxu0 0.0
      %1215 = vmatprep.subr.mxu0 0.0
      %1216 = vmatpush1.msra.mxu0 0.0
      %1217 = vmatprep.subr.mxu0 0.0
      %1218 = vmatpush1.msra.mxu0 0.0
      %1219 = vmatprep.subr.mxu0 0.0
      %1220 = vmatpush1.msra.mxu0 0.0
      %1221 = vmatprep.subr.mxu0 0.0
      %1222 = vmatpush1.msra.mxu0 0.0
      %1223 = vmatprep.subr.mxu0 0.0
      %1224 = vmatpush1.msra.mxu0 0.0
      %1225 = vmatprep.subr.mxu0 0.0
      %1226 = vmatpush1.msra.mxu0 0.0
      %1227 = vmatprep.subr.mxu0 0.0
      %1228 = vmatpush1.msra.mxu0 0.0
      %1229 = vmatprep.subr.mxu0 0.0
      %1230 = vmatpush1.msra.mxu0 0.0
      %1231 = vmatprep.subr.mxu0 0.0
      %1232 = vmatpush1.msra.mxu0 0.0
      %1233 = vmatprep.subr.mxu0 0.0
      %1234 = vmatpush1.msra.mxu0 0.0
      %1235 = vmatprep.subr.mxu0 0.0
      %1236 = vmatpush1.msra.mxu0 0.0
      %1237 = vmatprep.subr.mxu0 0.0
      %1238 = vmatpush1.msra.mxu0 0.0
      %1239 = vmatprep.subr.mxu0 0.0
      %1240 = vmatpush1.msra.mxu0 0.0
      %1241 = vmatprep.subr.mxu0 0.0
      %1242 = vmatpush1.msra.mxu0 0.0
      %1243 = vmatprep.subr.mxu0 0.0
      %1244 = vmatpush1.msra.mxu0 0.0
      %1245 = vmatprep.subr.mxu0 0.0
      %1246 = vmatpush1.msra.mxu0 0.0
      %1247 = vmatprep.subr.mxu0 0.0
      %1248 = vmatpush1.msra.mxu0 0.0
      %1249 = vmatprep.subr.mxu0 0.0
      %1250 = vmatpush1.msra.mxu0 0.0
      %1251 = vmatprep.subr.mxu0 0.0
      %1252 = vmatpush1.msra.mxu0 0.0
      %1253 = vmatprep.subr.mxu0 0.0
      %1254 = vmatpush1.msra.mxu0 0.0
      %1255 = vmatprep.subr.mxu0 0.0
      %1256 = vmatpush1.msra.mxu0 0.0
      %1257 = vmatprep.subr.mxu0 0.0
      %1258 = vmatpush1.msra.mxu0 0.0
      %1259 = vmatprep.subr.mxu0 0.0
      %1260 = vmatpush1.msra.mxu0 0.0
      %1261 = vmatprep.subr.mxu0 0.0
      %1262 = vmatpush1.msra.mxu0 0.0
      %1263 = vmatprep.subr.mxu0 0.0
      %1264 = vmatpush1.msra.mxu0 0.0
      %1265 = vmatprep.subr.mxu0 0.0
      %1266 = vmatpush1.msra.mxu0 0.0
      %1267 = vmatprep.subr.mxu0 0.0
      %1268 = vmatpush1.msra.mxu0 0.0
      %1269 = vmatprep.subr.mxu0 0.0
      %1270 = vmatpush1.msra.mxu0 0.0
      %1271 = vmatprep.subr.mxu0 0.0
      %1272 = vmatpush1.msra.mxu0 0.0
      %1273 = vmatprep.mubr.f32.mxu0 0.0
      %1274 = vmatmul.mubr.f32.gmra.mrb[0].mxu0 %v849
      %v1275 = vpop.f32.mrb[0].mxu0
      %v1276 = vadd.f32 %v703, %v1275
      %v1277 = vpop.f32.mrb[0].mxu0
      %v1278 = vadd.f32 %v705, %v1277
      %1279 = vdwg.mxu0
      %1280 = vmatprep.subr.mxu0 %v212
      %1281 = vmatpush1.msra.mxu0 %v211
      %1282 = vmatprep.subr.mxu0 %v273
      %1283 = vmatpush1.msra.mxu0 %v270
      %1284 = vmatprep.subr.mxu0 0.0
      %1285 = vmatpush1.msra.mxu0 0.0
      %1286 = vmatprep.subr.mxu0 0.0
      %1287 = vmatpush1.msra.mxu0 0.0
      %1288 = vmatprep.subr.mxu0 0.0
      %1289 = vmatpush1.msra.mxu0 0.0
      %1290 = vmatprep.subr.mxu0 0.0
      %1291 = vmatpush1.msra.mxu0 0.0
      %1292 = vmatprep.subr.mxu0 0.0
      %1293 = vmatpush1.msra.mxu0 0.0
      %1294 = vmatprep.subr.mxu0 0.0
      %1295 = vmatpush1.msra.mxu0 0.0
      %1296 = vmatprep.subr.mxu0 0.0
      %1297 = vmatpush1.msra.mxu0 0.0
      %1298 = vmatprep.subr.mxu0 0.0
      %1299 = vmatpush1.msra.mxu0 0.0
      %1300 = vmatprep.subr.mxu0 0.0
      %1301 = vmatpush1.msra.mxu0 0.0
      %1302 = vmatprep.subr.mxu0 0.0
      %1303 = vmatpush1.msra.mxu0 0.0
      %1304 = vmatprep.subr.mxu0 0.0
      %1305 = vmatpush1.msra.mxu0 0.0
      %1306 = vmatprep.subr.mxu0 0.0
      %1307 = vmatpush1.msra.mxu0 0.0
      %1308 = vmatprep.subr.mxu0 0.0
      %1309 = vmatpush1.msra.mxu0 0.0
      %1310 = vmatprep.subr.mxu0 0.0
      %1311 = vmatpush1.msra.mxu0 0.0
      %1312 = vmatprep.subr.mxu0 0.0
      %1313 = vmatpush1.msra.mxu0 0.0
      %1314 = vmatprep.subr.mxu0 0.0
      %1315 = vmatpush1.msra.mxu0 0.0
      %1316 = vmatprep.subr.mxu0 0.0
      %1317 = vmatpush1.msra.mxu0 0.0
      %1318 = vmatprep.subr.mxu0 0.0
      %1319 = vmatpush1.msra.mxu0 0.0
      %1320 = vmatprep.subr.mxu0 0.0
      %1321 = vmatpush1.msra.mxu0 0.0
      %1322 = vmatprep.subr.mxu0 0.0
      %1323 = vmatpush1.msra.mxu0 0.0
      %1324 = vmatprep.subr.mxu0 0.0
      %1325 = vmatpush1.msra.mxu0 0.0
      %1326 = vmatprep.subr.mxu0 0.0
      %1327 = vmatpush1.msra.mxu0 0.0
      %1328 = vmatprep.subr.mxu0 0.0
      %1329 = vmatpush1.msra.mxu0 0.0
      %1330 = vmatprep.subr.mxu0 0.0
      %1331 = vmatpush1.msra.mxu0 0.0
      %1332 = vmatprep.subr.mxu0 0.0
      %1333 = vmatpush1.msra.mxu0 0.0
      %1334 = vmatprep.subr.mxu0 0.0
      %1335 = vmatpush1.msra.mxu0 0.0
      %1336 = vmatprep.subr.mxu0 0.0
      %1337 = vmatpush1.msra.mxu0 0.0
      %1338 = vmatprep.subr.mxu0 0.0
      %1339 = vmatpush1.msra.mxu0 0.0
      %1340 = vmatprep.subr.mxu0 0.0
      %1341 = vmatpush1.msra.mxu0 0.0
      %1342 = vmatprep.subr.mxu0 0.0
      %1343 = vmatpush1.msra.mxu0 0.0
      %1344 = vmatprep.mubr.f32.mxu0 0.0
      %1345 = vmatmul.mubr.f32.gmra.mrb[0].mxu0 %v849
      %v1346 = vpop.f32.mrb[0].mxu0
      %v1347 = vadd.f32 %v774, %v1346
      %v1348 = vpop.f32.mrb[0].mxu0
      %v1349 = vadd.f32 %v776, %v1348
      %1350 = vdwg.mxu0
      %1351 = vmatprep.subr.mxu0 0.0
      %1352 = vmatpush1.msra.mxu0 %v213
      %1353 = vmatprep.subr.mxu0 0.0
      %1354 = vmatpush1.msra.mxu0 %v276
      %1355 = vmatprep.subr.mxu0 0.0
      %1356 = vmatpush1.msra.mxu0 0.0
      %1357 = vmatprep.subr.mxu0 0.0
      %1358 = vmatpush1.msra.mxu0 0.0
      %1359 = vmatprep.subr.mxu0 0.0
      %1360 = vmatpush1.msra.mxu0 0.0
      %1361 = vmatprep.subr.mxu0 0.0
      %1362 = vmatpush1.msra.mxu0 0.0
      %1363 = vmatprep.subr.mxu0 0.0
      %1364 = vmatpush1.msra.mxu0 0.0
      %1365 = vmatprep.subr.mxu0 0.0
      %1366 = vmatpush1.msra.mxu0 0.0
      %1367 = vmatprep.subr.mxu0 0.0
      %1368 = vmatpush1.msra.mxu0 0.0
      %1369 = vmatprep.subr.mxu0 0.0
      %1370 = vmatpush1.msra.mxu0 0.0
      %1371 = vmatprep.subr.mxu0 0.0
      %1372 = vmatpush1.msra.mxu0 0.0
      %1373 = vmatprep.subr.mxu0 0.0
      %1374 = vmatpush1.msra.mxu0 0.0
      %1375 = vmatprep.subr.mxu0 0.0
      %1376 = vmatpush1.msra.mxu0 0.0
      %1377 = vmatprep.subr.mxu0 0.0
      %1378 = vmatpush1.msra.mxu0 0.0
      %1379 = vmatprep.subr.mxu0 0.0
      %1380 = vmatpush1.msra.mxu0 0.0
      %1381 = vmatprep.subr.mxu0 0.0
      %1382 = vmatpush1.msra.mxu0 0.0
      %1383 = vmatprep.subr.mxu0 0.0
      %1384 = vmatpush1.msra.mxu0 0.0
      %1385 = vmatprep.subr.mxu0 0.0
      %1386 = vmatpush1.msra.mxu0 0.0
      %1387 = vmatprep.subr.mxu0 0.0
      %1388 = vmatpush1.msra.mxu0 0.0
      %1389 = vmatprep.subr.mxu0 0.0
      %1390 = vmatpush1.msra.mxu0 0.0
      %1391 = vmatprep.subr.mxu0 0.0
      %1392 = vmatpush1.msra.mxu0 0.0
      %1393 = vmatprep.subr.mxu0 0.0
      %1394 = vmatpush1.msra.mxu0 0.0
      %1395 = vmatprep.subr.mxu0 0.0
      %1396 = vmatpush1.msra.mxu0 0.0
      %1397 = vmatprep.subr.mxu0 0.0
      %1398 = vmatpush1.msra.mxu0 0.0
      %1399 = vmatprep.subr.mxu0 0.0
      %1400 = vmatpush1.msra.mxu0 0.0
      %1401 = vmatprep.subr.mxu0 0.0
      %1402 = vmatpush1.msra.mxu0 0.0
      %1403 = vmatprep.subr.mxu0 0.0
      %1404 = vmatpush1.msra.mxu0 0.0
      %1405 = vmatprep.subr.mxu0 0.0
      %1406 = vmatpush1.msra.mxu0 0.0
      %1407 = vmatprep.subr.mxu0 0.0
      %1408 = vmatpush1.msra.mxu0 0.0
      %1409 = vmatprep.subr.mxu0 0.0
      %1410 = vmatpush1.msra.mxu0 0.0
      %1411 = vmatprep.subr.mxu0 0.0
      %1412 = vmatpush1.msra.mxu0 0.0
      %1413 = vmatprep.subr.mxu0 0.0
      %1414 = vmatpush1.msra.mxu0 0.0
      %1415 = vmatprep.mubr.f32.mxu0 0.0
      %1416 = vmatmul.mubr.f32.gmra.mrb[0].mxu0 %v849
      %v1417 = vpop.f32.mrb[0].mxu0
      %v1418 = vadd.f32 %v845, %v1417
      %v1419 = vpop.f32.mrb[0].mxu0
      %1420 = vdwg.mxu0
      %v1435 = vcombine.low %v921, %v923
      %v1436 = vcombine.low %v992, %v994
      %v1437 = vcombine.low %v1063, %v1065
      %v1438 = vcombine.low %v1134, %v1136
      %v1439 = vcombine.low %v1205, %v1207
      %v1440 = vcombine.low %v1276, %v1278
      %v1441 = vcombine.low %v1347, %v1349
      %s1449 = smul.u32 %s19, 15
      %s1450 = smul.addr %s1449, 4
      %s1451 = scalar_lea.vmem [#allocation2], %s1450
      %1452 = vst [vmem:[%s1451] sm:$0xff] %v1435
      %1453 = vst [vmem:[%s1451 + $0x8] sm:$0xff] %v1436
      %1454 = vst [vmem:[%s1451 + $0x10] sm:$0xff] %v1437
      %1455 = vst [vmem:[%s1451 + $0x18] sm:$0xff] %v1438
      %1456 = vst [vmem:[%s1451 + $0x20] sm:$0xff] %v1439
      %1457 = vst [vmem:[%s1451 + $0x28] sm:$0xff] %v1440
      %1458 = vst [vmem:[%s1451 + $0x30] sm:$0xff] %v1441
      %1459 = vst [vmem:[%s1451 + $0x38] sm:$0xf] %v1418
      %p1460 = scmp.eq.s32.totalorder %s19, 0
      // Predicated region
      $region33: #{conv2d_unit.1} parent=31 // pred_check
        %p1461 = pneg %p1460
      $region34: #{conv2d_unit.1} parent=31 // pred_check_branch
        %1463 = sbr.rel (%p1461) target = $region36
      $region35: #{conv2d_unit.1} parent=31 // pred_region
        %v1464 = vld [vmem:[%s2] sm:$0xf]
        %v1465 = vld [vmem:[#allocation2] sm:$0xff]
        %v1466 = vld [vmem:[#allocation2 + $0x8] sm:$0xff]
        %v1467 = vld [vmem:[#allocation2 + $0x10] sm:$0xff]
        %v1468 = vld [vmem:[#allocation2 + $0x18] sm:$0xff]
        %v1469 = vld [vmem:[#allocation2 + $0x20] sm:$0xff]
        %v1470 = vld [vmem:[#allocation2 + $0x28] sm:$0xff]
        %v1471 = vld [vmem:[#allocation2 + $0x30] sm:$0xff]
        %v1472 = vld [vmem:[#allocation2 + $0x38] sm:$0xf]
        %v1480 = vcombine.high %v1465, %v1465
        %v1481 = vcombine.high %v1466, %v1466
        %v1482 = vcombine.high %v1467, %v1467
        %v1483 = vcombine.high %v1468, %v1468
        %v1484 = vcombine.high %v1469, %v1469
        %v1485 = vcombine.high %v1470, %v1470
        %v1486 = vcombine.high %v1471, %v1471
        %v1494 = vsel %vm235, %v1465, 0.0
        %v1495 = vsel %vm235, %v1480, 0.0
        %v1496 = vadd.f32 %v1494, %v1495
        %v1497 = vsel %vm235, %v1466, 0.0
        %v1498 = vadd.f32 %v1496, %v1497
        %v1499 = vsel %vm235, %v1481, 0.0
        %v1500 = vadd.f32 %v1498, %v1499
        %v1501 = vsel %vm235, %v1467, 0.0
        %v1502 = vadd.f32 %v1500, %v1501
        %v1503 = vsel %vm235, %v1482, 0.0
        %v1504 = vadd.f32 %v1502, %v1503
        %v1505 = vsel %vm235, %v1468, 0.0
        %v1506 = vadd.f32 %v1504, %v1505
        %v1507 = vsel %vm235, %v1483, 0.0
        %v1508 = vadd.f32 %v1506, %v1507
        %v1509 = vsel %vm235, %v1469, 0.0
        %v1510 = vadd.f32 %v1508, %v1509
        %v1511 = vsel %vm235, %v1484, 0.0
        %v1512 = vadd.f32 %v1510, %v1511
        %v1513 = vsel %vm235, %v1470, 0.0
        %v1514 = vadd.f32 %v1512, %v1513
        %v1515 = vsel %vm235, %v1485, 0.0
        %v1516 = vadd.f32 %v1514, %v1515
        %v1517 = vsel %vm235, %v1471, 0.0
        %v1518 = vadd.f32 %v1516, %v1517
        %v1519 = vsel %vm235, %v1486, 0.0
        %v1520 = vadd.f32 %v1518, %v1519
        %v1521 = vsel %vm235, %v1472, 0.0
        %v1522 = vadd.f32 %v1520, %v1521
        %1523 = vadd.xlane.f32.xlu0 %v1522
        %v1524 = vpop.xlane.xlu0 %1523
        %v1525 = vadd.f32 %v1524, 0.0
        %v1526 = vmul.f32 %v1465, %v1465
        %v1527 = vmul.f32 %v1466, %v1466
        %v1528 = vmul.f32 %v1467, %v1467
        %v1529 = vmul.f32 %v1468, %v1468
        %v1530 = vmul.f32 %v1469, %v1469
        %v1531 = vmul.f32 %v1470, %v1470
        %v1532 = vmul.f32 %v1471, %v1471
        %v1533 = vmul.f32 %v1472, %v1472
        %v1541 = vcombine.high %v1526, %v1526
        %v1542 = vcombine.high %v1527, %v1527
        %v1543 = vcombine.high %v1528, %v1528
        %v1544 = vcombine.high %v1529, %v1529
        %v1545 = vcombine.high %v1530, %v1530
        %v1546 = vcombine.high %v1531, %v1531
        %v1547 = vcombine.high %v1532, %v1532
        %v1555 = vsel %vm235, %v1526, 0.0
        %v1556 = vsel %vm235, %v1541, 0.0
        %v1557 = vadd.f32 %v1555, %v1556
        %v1558 = vsel %vm235, %v1527, 0.0
        %v1559 = vadd.f32 %v1557, %v1558
        %v1560 = vsel %vm235, %v1542, 0.0
        %v1561 = vadd.f32 %v1559, %v1560
        %v1562 = vsel %vm235, %v1528, 0.0
        %v1563 = vadd.f32 %v1561, %v1562
        %v1564 = vsel %vm235, %v1543, 0.0
        %v1565 = vadd.f32 %v1563, %v1564
        %v1566 = vsel %vm235, %v1529, 0.0
        %v1567 = vadd.f32 %v1565, %v1566
        %v1568 = vsel %vm235, %v1544, 0.0
        %v1569 = vadd.f32 %v1567, %v1568
        %v1570 = vsel %vm235, %v1530, 0.0
        %v1571 = vadd.f32 %v1569, %v1570
        %v1572 = vsel %vm235, %v1545, 0.0
        %v1573 = vadd.f32 %v1571, %v1572
        %v1574 = vsel %vm235, %v1531, 0.0
        %v1575 = vadd.f32 %v1573, %v1574
        %v1576 = vsel %vm235, %v1546, 0.0
        %v1577 = vadd.f32 %v1575, %v1576
        %v1578 = vsel %vm235, %v1532, 0.0
        %v1579 = vadd.f32 %v1577, %v1578
        %v1580 = vsel %vm235, %v1547, 0.0
        %v1581 = vadd.f32 %v1579, %v1580
        %v1582 = vsel %vm235, %v1533, 0.0
        %v1583 = vadd.f32 %v1581, %v1582
        %1584 = vadd.xlane.f32.xlu0 %v1583
        %v1585 = vpop.xlane.xlu0 %1584
        %v1586 = vadd.f32 %v1585, 0.0
        %v1587 = vmul.f32 %v1525, 0.00952381
        %v1588 = vmul.f32 %v1586, 0.00952381
        %v1589 = vmul.f32 %v1587, %v1587
        %v1590 = vsub.f32 %v1588, %v1589
        %v1591 = vmax.f32 %v1590, 0.0
        %v1592 = vadd.f32 %v1591, 1e-05
        %v1593 = vrsqrt.pop %v1592
        %v1594 = vmul.f32 %v1464, %v1593
        %v1595 = vmul.f32 %v1587, %v1594
        %1597 = vrot.lane.b32.xlu0 %v1595, 1
        %v1598 = vpop.permute.xlu0 %1597
        %v1600 = vsub.f32 %v1464, %v1598
        %1602 = vset.pattern.permute.xlu0 0
        %1603 = vperm.xlu0 %1602, %v1594
        %v1604 = vpop.permute.xlu0 %1603
        %v1606 = vunpack.c.l.s4 839922192
        %v1607 = vunpack.c.0.s8 %v1606
        %v1608 = vlaneseq
        %v1609 = vshrl.u32 %v1608, 7
        %v1610 = vsub.s32 %v1607, %v1609
        %v1611 = vrot.slane %v1604, %v1610
        %v1613 = vmul.f32 %v1465, %v1611
        %v1614 = vmul.f32 %v1466, %v1611
        %v1615 = vmul.f32 %v1467, %v1611
        %v1616 = vmul.f32 %v1468, %v1611
        %v1617 = vmul.f32 %v1469, %v1611
        %v1618 = vmul.f32 %v1470, %v1611
        %v1619 = vmul.f32 %v1471, %v1611
        %v1620 = vmul.f32 %v1472, %v1611
        %1622 = vset.pattern.permute.xlu0 1
        %1623 = vperm.xlu0 %1622, %v1600
        %v1624 = vpop.permute.xlu0 %1623
        %v1626 = vunpack.c.l.s4 839922192
        %v1627 = vunpack.c.0.s8 %v1626
        %v1628 = vlaneseq
        %v1629 = vshrl.u32 %v1628, 7
        %v1630 = vsub.s32 %v1627, %v1629
        %v1631 = vrot.slane %v1624, %v1630
        %v1633 = vadd.f32 %v1613, %v1631
        %v1634 = vadd.f32 %v1614, %v1631
        %v1635 = vadd.f32 %v1615, %v1631
        %v1636 = vadd.f32 %v1616, %v1631
        %v1637 = vadd.f32 %v1617, %v1631
        %v1638 = vadd.f32 %v1618, %v1631
        %v1639 = vadd.f32 %v1619, %v1631
        %v1640 = vadd.f32 %v1620, %v1631
        %vm1641 = vcmp.ge.f32.partialorder %v1633, 0.0
        %vm1642 = vcmp.ge.f32.partialorder %v1634, 0.0
        %vm1643 = vcmp.ge.f32.partialorder %v1635, 0.0
        %vm1644 = vcmp.ge.f32.partialorder %v1636, 0.0
        %vm1645 = vcmp.ge.f32.partialorder %v1637, 0.0
        %vm1646 = vcmp.ge.f32.partialorder %v1638, 0.0
        %vm1647 = vcmp.ge.f32.partialorder %v1639, 0.0
        %vm1648 = vcmp.ge.f32.partialorder %v1640, 0.0
        %1650 = vset.pattern.permute.xlu0 2
        %1651 = vperm.xlu0 %1650, %v1464
        %v1652 = vpop.permute.xlu0 %1651
        %v1661 = vcombine.high %v1633, %v1633
        %v1662 = vcombine.high %v1634, %v1634
        %v1663 = vcombine.high %v1635, %v1635
        %v1664 = vcombine.high %v1636, %v1636
        %v1665 = vcombine.high %v1637, %v1637
        %v1666 = vcombine.high %v1638, %v1638
        %v1667 = vcombine.high %v1639, %v1639
        %v1675 = vmul.f32 %v1652, %v1633
        %v1676 = vmul.f32 %v1652, %v1661
        %v1677 = vmul.f32 %v1652, %v1634
        %v1678 = vmul.f32 %v1652, %v1662
        %v1679 = vmul.f32 %v1652, %v1635
        %v1680 = vmul.f32 %v1652, %v1663
        %v1681 = vmul.f32 %v1652, %v1636
        %v1682 = vmul.f32 %v1652, %v1664
        %v1683 = vmul.f32 %v1652, %v1637
        %v1684 = vmul.f32 %v1652, %v1665
        %v1685 = vmul.f32 %v1652, %v1638
        %v1686 = vmul.f32 %v1652, %v1666
        %v1687 = vmul.f32 %v1652, %v1639
        %v1688 = vmul.f32 %v1652, %v1667
        %v1689 = vmul.f32 %v1652, %v1640
        %v1704 = vcombine.low %v1675, %v1676
        %v1705 = vcombine.low %v1677, %v1678
        %v1706 = vcombine.low %v1679, %v1680
        %v1707 = vcombine.low %v1681, %v1682
        %v1708 = vcombine.low %v1683, %v1684
        %v1709 = vcombine.low %v1685, %v1686
        %v1710 = vcombine.low %v1687, %v1688
        %v1718 = vsel %vm1641, %v1633, %v1704
        %v1719 = vsel %vm1642, %v1634, %v1705
        %v1720 = vsel %vm1643, %v1635, %v1706
        %v1721 = vsel %vm1644, %v1636, %v1707
        %v1722 = vsel %vm1645, %v1637, %v1708
        %v1723 = vsel %vm1646, %v1638, %v1709
        %v1724 = vsel %vm1647, %v1639, %v1710
        %v1725 = vsel %vm1648, %v1640, %v1689
        %1726 = vst [vmem:[%s196] sm:$0xff] %v1718
        %1727 = vst [vmem:[%s196 + $0x8] sm:$0xff] %v1719
        %1728 = vst [vmem:[%s196 + $0x10] sm:$0xff] %v1720
        %1729 = vst [vmem:[%s196 + $0x18] sm:$0xff] %v1721
        %1730 = vst [vmem:[%s196 + $0x20] sm:$0xff] %v1722
        %1731 = vst [vmem:[%s196 + $0x28] sm:$0xff] %v1723
        %1732 = vst [vmem:[%s196 + $0x30] sm:$0xff] %v1724
        %1733 = vst [vmem:[%s196 + $0x38] sm:$0xf] %v1725
      $region36: #{conv2d_unit.1} parent=31 // pred_fallthru
        _
      %p1734 = scmp.lt.s32.totalorder %s18, 1
      %s1735 = scalar_select %p1734, %s18, 1
      %s1736 = smul.addr %s1735, 15
      %s1737 = smul.addr %s1736, 4
      %s1738 = scalar_lea.vmem %s3, %s1737
      // Predicated region
      $region37: #{conv2d_unit.1} parent=31 // pred_check
        %p1739 = pneg %p114
      $region38: #{conv2d_unit.1} parent=31 // pred_check_branch
        %1741 = sbr.rel (%p1739) target = $region40
      $region39: #{conv2d_unit.1} parent=31 // pred_region
        _
      $region40: #{conv2d_unit.1} parent=31 // pred_fallthru
        _
    $region32: #{conv2d_unit.1} parent=5 // pred_fallthru
      _
    %p1742 = scmp.le.s32.totalorder 2, %s9
    // Predicated region
    $region41: #{conv2d_unit.1} parent=5 // pred_check
      %p1743 = pneg %p1742
    $region42: #{conv2d_unit.1} parent=5 // pred_check_branch
      %1745 = sbr.rel (%p1743) target = $region44
    $region43: #{conv2d_unit.1} parent=5 // pred_region
      %s1746 = ssub.s32 %s9, 2
      // Predicated region
      $region45: #{conv2d_unit.1} parent=43 // pred_check
        %p1747 = pneg %p120
      $region46: #{conv2d_unit.1} parent=43 // pred_check_branch
        %1749 = sbr.rel (%p1747) target = $region48
      $region47: #{conv2d_unit.1} parent=43 // pred_region
        %p1750 = scmp.lt.s32.totalorder %s20, 1
        %s1751 = scalar_select %p1750, %s20, 1
        %s1752 = smul.addr %s1751, 15
        %s1753 = smul.addr %s1752, 4
        %s1754 = scalar_lea.vmem %s3, %s1753
      $region48: #{conv2d_unit.1} parent=43 // pred_fallthru
        _
    $region44: #{conv2d_unit.1} parent=5 // pred_fallthru
      _
  $region6: #{conv2d_unit.1} parent=0 // loop_footer
    %s13 = sadd.s32 1, %s9
  $region7: #{conv2d_unit.1} parent=0 // loop_footer_branch
    %8 = sbr.rel target = $region3
  $region8: #{conv2d_unit.1} parent=0 // loop_exit
    _

</llo_original>
